<compile_context>
chip_gen: v7x
topology: tpu7x:2x2x1
jax: 0.10.0
libtpu: 0.0.40
codegen_flags: <defaults>
</compile_context>

<pallas_src>
import functools
import math

import jax
import jax.numpy as jnp
from jax import lax
from jax.experimental import pallas as pl
from jax.experimental.pallas import tpu as pltpu

KERNEL_SIZE = 5
PAD = (KERNEL_SIZE - 1) // 2


def _dwconv_gelu_kernel(x_ref, top_ref, bot_ref, w_ref, b_ref, o_ref, *, C, approximate):
    # x_ref   : (1, TILE_H, W*C)  rows [j*TILE_H, (j+1)*TILE_H) of the (unpadded) image
    # top_ref : (1, 8, W*C)       aligned 8-row slab just above the tile (clamped at j=0)
    # bot_ref : (1, 8, W*C)       aligned 8-row slab just below the tile (clamped at j=last)
    # w_ref   : (K*K, 8, W*C)     pre-broadcast, W-edge-masked taps (resident)
    # b_ref   : (8, W*C)          pre-broadcast bias (resident)
    # o_ref   : (1, TILE_H, W*C)
    T = o_ref.shape[1]
    WC = o_ref.shape[2]
    K = KERNEL_SIZE
    n_sub = T // 8
    j = pl.program_id(1)
    n_tiles = pl.num_programs(1)

    bias = b_ref[...].astype(jnp.float32)                       # (8, WC)
    row = lax.broadcasted_iota(jnp.int32, (8, WC), 0)            # sublane index

    # Halo slabs; zero their contribution when the tile touches the image border
    # (this reproduces the conv's zero padding along H without any padded copy).
    top = top_ref[0, :, :].astype(jnp.float32) * (j > 0).astype(jnp.float32)
    bot = bot_ref[0, :, :].astype(jnp.float32) * (j < n_tiles - 1).astype(jnp.float32)

    # TODO(synk): optional bf16 multiply / f32 accumulate path for v6e/v7x (torch does
    # the depthwise conv in f32, so f32 stays the default).
    for s in range(n_sub):
        cur = x_ref[0, s * 8:(s + 1) * 8, :].astype(jnp.float32)
        prv = top if s == 0 else x_ref[0, (s - 1) * 8:s * 8, :].astype(jnp.float32)
        nxt = bot if s == n_sub - 1 else x_ref[0, (s + 1) * 8:(s + 2) * 8, :].astype(jnp.float32)

        acc = bias
        for kh in range(K):
            d = kh - PAD
            if d == 0:
                slab = cur
            elif d > 0:
                # slab[i] = cur[i+d] for i < 8-d, else nxt[i+d-8]   (1 select + 1 sublane roll)
                slab = pltpu.roll(jnp.where(row < d, nxt, cur), 8 - d, axis=0)
            else:
                # slab[i] = cur[i+d] for i >= -d, else prv[8+i+d]
                slab = pltpu.roll(jnp.where(row >= 8 + d, prv, cur), -d, axis=0)
            for kw in range(K):
                # win[:, w*C + c] = slab[:, (w + kw - PAD)*C + c]   (lane roll on the XLU)
                shift = (-(kw - PAD) * C) % WC
                win = slab if shift == 0 else pltpu.roll(slab, shift, axis=1)
                # Edge-masked tap: zero where the source column falls outside [0, W),
                # so lane-roll wrap-around never contributes.
                acc = acc + win * w_ref[kh * K + kw].astype(jnp.float32)

        if approximate:
            # tanh-approx GELU runs on the EUP slot; numerics differ slightly from torch default.
            c0 = math.sqrt(2.0 / math.pi)
            out = 0.5 * acc * (1.0 + jnp.tanh(c0 * (acc + 0.044715 * acc * acc * acc)))
        else:
            # Exact GELU (matches torch.nn.GELU default): 0.5 * x * (1 + erf(x / sqrt(2)))
            out = 0.5 * acc * (1.0 + lax.erf(acc * (1.0 / math.sqrt(2.0))))
        o_ref[0, s * 8:(s + 1) * 8, :] = out.astype(o_ref.dtype)


def _pick_tile_h(H, B):
    # Largest multiple of 8 that divides H, capped at 128 rows; VMEM is never the
    # limiter here, and a big tile amortises the 16-row halo re-fetch and the
    # per-grid-step overhead.
    divisors = [t for t in range(8, min(H, 128) + 1, 8) if H % t == 0]
    tile_h = divisors[-1]
    # Keep >= 2 "parallel" grid steps so both v7x TensorCores get work.
    if B * (H // tile_h) < 2:
        smaller = [t for t in divisors if H // t >= 2]
        if smaller:
            tile_h = smaller[-1]
    return tile_h


def dwconv_forward(x, x_size, weight, bias, *, tile_h=None, approximate=False):
    """x: (B, N, C) with N = H*W; weight: (K, K, C); bias: (C,). Returns (B, N, C)."""
    H, W = x_size
    B, N, C = x.shape
    K = KERNEL_SIZE
    assert N == H * W
    WC = W * C
    # TODO(synk): add a masked-store / channel-padding path for shapes where W*C is
    # not a multiple of 128 or H is not a multiple of 8.
    assert WC % 128 == 0, f"W*C={WC} must be a multiple of 128 (lane width)"
    assert H % 8 == 0, f"H={H} must be a multiple of 8"
    if tile_h is None:
        tile_h = _pick_tile_h(H, B)
    assert H % tile_h == 0 and tile_h % 8 == 0
    n_tiles = H // tile_h
    hb = tile_h // 8
    n_row_blocks = H // 8

    # (B, N, C) -> (B, H, W*C): free reshape, channels stay fastest -> lane-dense rows.
    # No padded copy of the activation is ever written to HBM.
    x_rows = x.reshape(B, H, WC)

    # Pre-tile the 25 depthwise taps across W, zero columns whose source pixel falls
    # outside [0, W) (fuses W-padding into the weights), and pre-broadcast to 8
    # sublanes so the kernel does plain vector loads instead of splats.
    kw_off = jnp.arange(K)[:, None] - PAD                       # (K, 1)
    w_pos = jnp.arange(W)[None, :]                              # (1, W)
    valid = ((w_pos + kw_off) >= 0) & ((w_pos + kw_off) < W)    # (K, W) over kw
    wt = weight[:, :, None, :] * valid[None, :, :, None].astype(weight.dtype)  # (K,K,W,C)
    wt = jnp.broadcast_to(wt.reshape(K * K, 1, WC), (K * K, 8, WC))
    bias_b = jnp.broadcast_to(jnp.tile(bias, W).reshape(1, WC), (8, WC))

    # Right-size the scoped-VMEM request from the actual double-buffered block sizes.
    itemsize = jnp.dtype(x.dtype).itemsize
    blk_bytes = (2 * tile_h * WC * itemsize                 # main input block + output block
                 + 2 * 8 * WC * itemsize                    # top/bottom halo blocks
                 + (K * K) * 8 * WC * jnp.dtype(wt.dtype).itemsize
                 + 8 * WC * jnp.dtype(bias_b.dtype).itemsize)
    vmem_limit = int(min(96 * 1024 * 1024, max(4 * 1024 * 1024, 2 * blk_bytes + (2 << 20))))

    kernel = functools.partial(_dwconv_gelu_kernel, C=C, approximate=approximate)

    out = pl.pallas_call(
        kernel,
        out_shape=jax.ShapeDtypeStruct((B, H, WC), x.dtype),
        grid_spec=pltpu.PrefetchScalarGridSpec(
            num_scalar_prefetch=0,
            grid=(B, n_tiles),
            in_specs=[
                # rows of this output tile
                pl.BlockSpec((1, tile_h, WC), lambda b, j: (b, j, 0)),
                # aligned 8-row slab just above the tile (clamped at the top edge)
                pl.BlockSpec((1, 8, WC),
                             lambda b, j: (b, jnp.maximum(j * hb - 1, 0), 0)),
                # aligned 8-row slab just below the tile (clamped at the bottom edge)
                pl.BlockSpec((1, 8, WC),
                             lambda b, j: (b, jnp.minimum((j + 1) * hb, n_row_blocks - 1), 0)),
                # taps & bias: constant index maps -> resident across the grid
                pl.BlockSpec((K * K, 8, WC), lambda b, j: (0, 0, 0)),
                pl.BlockSpec((8, WC), lambda b, j: (0, 0)),
            ],
            out_specs=pl.BlockSpec((1, tile_h, WC), lambda b, j: (b, j, 0)),
        ),
        compiler_params=pltpu.CompilerParams(
            dimension_semantics=("parallel", "parallel"),
            vmem_limit_bytes=vmem_limit,
        ),
    )(x_rows, x_rows, x_rows, wt, bias_b)

    return out.reshape(B, H * W, C)


def _reference(x, x_size, weight, bias):
    """Pure-JAX reference of the PyTorch module (NHWC depthwise conv + exact GELU)."""
    H, W = x_size
    B, N, C = x.shape
    x_nhwc = x.reshape(B, H, W, C)
    k_hwio = weight.reshape(KERNEL_SIZE, KERNEL_SIZE, 1, C)
    y = lax.conv_general_dilated(
        x_nhwc, k_hwio,
        window_strides=(1, 1),
        padding=((PAD, PAD), (PAD, PAD)),
        dimension_numbers=("NHWC", "HWIO", "NHWC"),
        feature_group_count=C,
    ) + bias[None, None, None, :]
    y = jax.nn.gelu(y, approximate=False)
    return y.reshape(B, H * W, C)


if __name__ == "__main__":
    key = jax.random.PRNGKey(0)
    B, H, W, C = 2, 16, 16, 32   # hidden_features=32, spatial 16x16 -> seq N=256
    k_x, k_w, k_b = jax.random.split(key, 3)

    x = jax.random.normal(k_x, (B, H * W, C), dtype=jnp.float32)
    # Conv2d-style uniform init bound (groups=C -> fan_in = K*K)
    bound = 1.0 / math.sqrt(KERNEL_SIZE * KERNEL_SIZE)
    weight = jax.random.uniform(k_w, (KERNEL_SIZE, KERNEL_SIZE, C),
                                minval=-bound, maxval=bound, dtype=jnp.float32)
    bias = jax.random.uniform(k_b, (C,), minval=-bound, maxval=bound,
                              dtype=jnp.float32)

    out = dwconv_forward(x, (H, W), weight, bias)
    out = jax.block_until_ready(out)

    ref = _reference(x, (H, W), weight, bias)
    assert out.shape == (B, H * W, C)
    assert jnp.allclose(out, ref, atol=1e-4, rtol=1e-4), "mismatch vs reference"

    print("KERNEL_OK")
</pallas_src>

<mosaic_0001>
module attributes {stable_mosaic.version = 11 : i64} {
  func.func @_dwconv_gelu_kernel(%arg0: i32, %arg1: i32, %arg2: memref<1x16x512xf32, #tpu.memory_space<vmem>>, %arg3: memref<1x8x512xf32, #tpu.memory_space<vmem>>, %arg4: memref<1x8x512xf32, #tpu.memory_space<vmem>>, %arg5: memref<25x8x512xf32, #tpu.memory_space<vmem>>, %arg6: memref<8x512xf32, #tpu.memory_space<vmem>>, %arg7: memref<1x16x512xf32, #tpu.memory_space<vmem>>) attributes {dimension_semantics = [#tpu.dimension_semantics<parallel>, #tpu.dimension_semantics<parallel>], iteration_bounds = array<i64: 2, 1>, scalar_prefetch = 0 : i64, scratch_operands = 0 : i64, tpu.core_type = #tpu.core_type<tc>, window_params = [{transform_indices = @transform_0, window_bounds = array<i64: 1, 16, 512>}, {transform_indices = @transform_1, window_bounds = array<i64: 1, 8, 512>}, {transform_indices = @transform_2, window_bounds = array<i64: 1, 8, 512>}, {pipeline_mode = #tpu.pipeline_mode<synchronous>, transform_indices = @transform_3, window_bounds = array<i64: 25, 8, 512>}, {pipeline_mode = #tpu.pipeline_mode<synchronous>, transform_indices = @transform_4, window_bounds = array<i64: 8, 512>}, {transform_indices = @transform_5, window_bounds = array<i64: 1, 16, 512>}]} {
    %c0 = arith.constant 0 : index
    %c0_0 = arith.constant 0 : index
    %0 = vector.load %arg6[%c0, %c0_0] : memref<8x512xf32, #tpu.memory_space<vmem>>, vector<8x512xf32>
    %1 = tpu.iota {dimensions = array<i32: 0>} : vector<8x512xi32>
    %c0_1 = arith.constant 0 : index
    %c0_2 = arith.constant 0 : index
    %c0_3 = arith.constant 0 : index
    %2 = vector.load %arg3[%c0_1, %c0_2, %c0_3] : memref<1x8x512xf32, #tpu.memory_space<vmem>>, vector<1x8x512xf32>
    %3 = vector.shape_cast %2 : vector<1x8x512xf32> to vector<8x512xf32>
    %c0_i32 = arith.constant 0 : i32
    %4 = arith.cmpi sgt, %arg1, %c0_i32 : i32
    %5 = arith.extui %4 : i1 to i32
    %6 = arith.sitofp %5 : i32 to f32
    %7 = vector.broadcast %6 : f32 to vector<8x512xf32>
    %8 = arith.mulf %3, %7 : vector<8x512xf32>
    %c0_4 = arith.constant 0 : index
    %c0_5 = arith.constant 0 : index
    %c0_6 = arith.constant 0 : index
    %9 = vector.load %arg4[%c0_4, %c0_5, %c0_6] : memref<1x8x512xf32, #tpu.memory_space<vmem>>, vector<1x8x512xf32>
    %10 = vector.shape_cast %9 : vector<1x8x512xf32> to vector<8x512xf32>
    %c0_i32_7 = arith.constant 0 : i32
    %11 = arith.cmpi slt, %arg1, %c0_i32_7 : i32
    %12 = arith.extui %11 : i1 to i32
    %13 = arith.sitofp %12 : i32 to f32
    %14 = vector.broadcast %13 : f32 to vector<8x512xf32>
    %15 = arith.mulf %10, %14 : vector<8x512xf32>
    %c0_8 = arith.constant 0 : index
    %c0_9 = arith.constant 0 : index
    %c0_10 = arith.constant 0 : index
    %16 = vector.load %arg2[%c0_8, %c0_9, %c0_10] : memref<1x16x512xf32, #tpu.memory_space<vmem>>, vector<1x8x512xf32>
    %17 = vector.shape_cast %16 : vector<1x8x512xf32> to vector<8x512xf32>
    %c0_11 = arith.constant 0 : index
    %c8 = arith.constant 8 : index
    %c0_12 = arith.constant 0 : index
    %18 = vector.load %arg2[%c0_11, %c8, %c0_12] : memref<1x16x512xf32, #tpu.memory_space<vmem>>, vector<1x8x512xf32>
    %19 = vector.shape_cast %18 : vector<1x8x512xf32> to vector<8x512xf32>
    %c6_i32 = arith.constant 6 : i32
    %20 = vector.broadcast %c6_i32 : i32 to vector<8x512xi32>
    %21 = arith.cmpi sge, %1, %20 : vector<8x512xi32>
    %22 = arith.select %21, %8, %17 : vector<8x512xi1>, vector<8x512xf32>
    %c2_i32 = arith.constant 2 : i32
    %23 = tpu.dynamic_rotate %22 by %c2_i32 dim 0 : vector<8x512xf32>, i32 -> vector<8x512xf32>
    %c64_i32 = arith.constant 64 : i32
    %24 = tpu.dynamic_rotate %23 by %c64_i32 dim 1 : vector<8x512xf32>, i32 -> vector<8x512xf32>
    %c0_13 = arith.constant 0 : index
    %c0_14 = arith.constant 0 : index
    %c0_15 = arith.constant 0 : index
    %25 = vector.load %arg5[%c0_13, %c0_14, %c0_15] : memref<25x8x512xf32, #tpu.memory_space<vmem>>, vector<1x8x512xf32>
    %26 = vector.shape_cast %25 : vector<1x8x512xf32> to vector<8x512xf32>
    %27 = arith.mulf %24, %26 : vector<8x512xf32>
    %28 = arith.addf %0, %27 : vector<8x512xf32>
    %c32_i32 = arith.constant 32 : i32
    %29 = tpu.dynamic_rotate %23 by %c32_i32 dim 1 : vector<8x512xf32>, i32 -> vector<8x512xf32>
    %c1 = arith.constant 1 : index
    %c0_16 = arith.constant 0 : index
    %c0_17 = arith.constant 0 : index
    %30 = vector.load %arg5[%c1, %c0_16, %c0_17] : memref<25x8x512xf32, #tpu.memory_space<vmem>>, vector<1x8x512xf32>
    %31 = vector.shape_cast %30 : vector<1x8x512xf32> to vector<8x512xf32>
    %32 = arith.mulf %29, %31 : vector<8x512xf32>
    %33 = arith.addf %28, %32 : vector<8x512xf32>
    %c2 = arith.constant 2 : index
    %c0_18 = arith.constant 0 : index
    %c0_19 = arith.constant 0 : index
    %34 = vector.load %arg5[%c2, %c0_18, %c0_19] : memref<25x8x512xf32, #tpu.memory_space<vmem>>, vector<1x8x512xf32>
    %35 = vector.shape_cast %34 : vector<1x8x512xf32> to vector<8x512xf32>
    %36 = arith.mulf %23, %35 : vector<8x512xf32>
    %37 = arith.addf %33, %36 : vector<8x512xf32>
    %c480_i32 = arith.constant 480 : i32
    %38 = tpu.dynamic_rotate %23 by %c480_i32 dim 1 : vector<8x512xf32>, i32 -> vector<8x512xf32>
    %c3 = arith.constant 3 : index
    %c0_20 = arith.constant 0 : index
    %c0_21 = arith.constant 0 : index
    %39 = vector.load %arg5[%c3, %c0_20, %c0_21] : memref<25x8x512xf32, #tpu.memory_space<vmem>>, vector<1x8x512xf32>
    %40 = vector.shape_cast %39 : vector<1x8x512xf32> to vector<8x512xf32>
    %41 = arith.mulf %38, %40 : vector<8x512xf32>
    %42 = arith.addf %37, %41 : vector<8x512xf32>
    %c448_i32 = arith.constant 448 : i32
    %43 = tpu.dynamic_rotate %23 by %c448_i32 dim 1 : vector<8x512xf32>, i32 -> vector<8x512xf32>
    %c4 = arith.constant 4 : index
    %c0_22 = arith.constant 0 : index
    %c0_23 = arith.constant 0 : index
    %44 = vector.load %arg5[%c4, %c0_22, %c0_23] : memref<25x8x512xf32, #tpu.memory_space<vmem>>, vector<1x8x512xf32>
    %45 = vector.shape_cast %44 : vector<1x8x512xf32> to vector<8x512xf32>
    %46 = arith.mulf %43, %45 : vector<8x512xf32>
    %47 = arith.addf %42, %46 : vector<8x512xf32>
    %c7_i32 = arith.constant 7 : i32
    %48 = vector.broadcast %c7_i32 : i32 to vector<8x512xi32>
    %49 = arith.cmpi sge, %1, %48 : vector<8x512xi32>
    %50 = arith.select %49, %8, %17 : vector<8x512xi1>, vector<8x512xf32>
    %c1_i32 = arith.constant 1 : i32
    %51 = tpu.dynamic_rotate %50 by %c1_i32 dim 0 : vector<8x512xf32>, i32 -> vector<8x512xf32>
    %c64_i32_24 = arith.constant 64 : i32
    %52 = tpu.dynamic_rotate %51 by %c64_i32_24 dim 1 : vector<8x512xf32>, i32 -> vector<8x512xf32>
    %c5 = arith.constant 5 : index
    %c0_25 = arith.constant 0 : index
    %c0_26 = arith.constant 0 : index
    %53 = vector.load %arg5[%c5, %c0_25, %c0_26] : memref<25x8x512xf32, #tpu.memory_space<vmem>>, vector<1x8x512xf32>
    %54 = vector.shape_cast %53 : vector<1x8x512xf32> to vector<8x512xf32>
    %55 = arith.mulf %52, %54 : vector<8x512xf32>
    %56 = arith.addf %47, %55 : vector<8x512xf32>
    %c32_i32_27 = arith.constant 32 : i32
    %57 = tpu.dynamic_rotate %51 by %c32_i32_27 dim 1 : vector<8x512xf32>, i32 -> vector<8x512xf32>
    %c6 = arith.constant 6 : index
    %c0_28 = arith.constant 0 : index
    %c0_29 = arith.constant 0 : index
    %58 = vector.load %arg5[%c6, %c0_28, %c0_29] : memref<25x8x512xf32, #tpu.memory_space<vmem>>, vector<1x8x512xf32>
    %59 = vector.shape_cast %58 : vector<1x8x512xf32> to vector<8x512xf32>
    %60 = arith.mulf %57, %59 : vector<8x512xf32>
    %61 = arith.addf %56, %60 : vector<8x512xf32>
    %c7 = arith.constant 7 : index
    %c0_30 = arith.constant 0 : index
    %c0_31 = arith.constant 0 : index
    %62 = vector.load %arg5[%c7, %c0_30, %c0_31] : memref<25x8x512xf32, #tpu.memory_space<vmem>>, vector<1x8x512xf32>
    %63 = vector.shape_cast %62 : vector<1x8x512xf32> to vector<8x512xf32>
    %64 = arith.mulf %51, %63 : vector<8x512xf32>
    %65 = arith.addf %61, %64 : vector<8x512xf32>
    %c480_i32_32 = arith.constant 480 : i32
    %66 = tpu.dynamic_rotate %51 by %c480_i32_32 dim 1 : vector<8x512xf32>, i32 -> vector<8x512xf32>
    %c8_33 = arith.constant 8 : index
    %c0_34 = arith.constant 0 : index
    %c0_35 = arith.constant 0 : index
    %67 = vector.load %arg5[%c8_33, %c0_34, %c0_35] : memref<25x8x512xf32, #tpu.memory_space<vmem>>, vector<1x8x512xf32>
    %68 = vector.shape_cast %67 : vector<1x8x512xf32> to vector<8x512xf32>
    %69 = arith.mulf %66, %68 : vector<8x512xf32>
    %70 = arith.addf %65, %69 : vector<8x512xf32>
    %c448_i32_36 = arith.constant 448 : i32
    %71 = tpu.dynamic_rotate %51 by %c448_i32_36 dim 1 : vector<8x512xf32>, i32 -> vector<8x512xf32>
    %c9 = arith.constant 9 : index
    %c0_37 = arith.constant 0 : index
    %c0_38 = arith.constant 0 : index
    %72 = vector.load %arg5[%c9, %c0_37, %c0_38] : memref<25x8x512xf32, #tpu.memory_space<vmem>>, vector<1x8x512xf32>
    %73 = vector.shape_cast %72 : vector<1x8x512xf32> to vector<8x512xf32>
    %74 = arith.mulf %71, %73 : vector<8x512xf32>
    %75 = arith.addf %70, %74 : vector<8x512xf32>
    %c64_i32_39 = arith.constant 64 : i32
    %76 = tpu.dynamic_rotate %17 by %c64_i32_39 dim 1 : vector<8x512xf32>, i32 -> vector<8x512xf32>
    %c10 = arith.constant 10 : index
    %c0_40 = arith.constant 0 : index
    %c0_41 = arith.constant 0 : index
    %77 = vector.load %arg5[%c10, %c0_40, %c0_41] : memref<25x8x512xf32, #tpu.memory_space<vmem>>, vector<1x8x512xf32>
    %78 = vector.shape_cast %77 : vector<1x8x512xf32> to vector<8x512xf32>
    %79 = arith.mulf %76, %78 : vector<8x512xf32>
    %80 = arith.addf %75, %79 : vector<8x512xf32>
    %c32_i32_42 = arith.constant 32 : i32
    %81 = tpu.dynamic_rotate %17 by %c32_i32_42 dim 1 : vector<8x512xf32>, i32 -> vector<8x512xf32>
    %c11 = arith.constant 11 : index
    %c0_43 = arith.constant 0 : index
    %c0_44 = arith.constant 0 : index
    %82 = vector.load %arg5[%c11, %c0_43, %c0_44] : memref<25x8x512xf32, #tpu.memory_space<vmem>>, vector<1x8x512xf32>
    %83 = vector.shape_cast %82 : vector<1x8x512xf32> to vector<8x512xf32>
    %84 = arith.mulf %81, %83 : vector<8x512xf32>
    %85 = arith.addf %80, %84 : vector<8x512xf32>
    %c12 = arith.constant 12 : index
    %c0_45 = arith.constant 0 : index
    %c0_46 = arith.constant 0 : index
    %86 = vector.load %arg5[%c12, %c0_45, %c0_46] : memref<25x8x512xf32, #tpu.memory_space<vmem>>, vector<1x8x512xf32>
    %87 = vector.shape_cast %86 : vector<1x8x512xf32> to vector<8x512xf32>
    %88 = arith.mulf %17, %87 : vector<8x512xf32>
    %89 = arith.addf %85, %88 : vector<8x512xf32>
    %c480_i32_47 = arith.constant 480 : i32
    %90 = tpu.dynamic_rotate %17 by %c480_i32_47 dim 1 : vector<8x512xf32>, i32 -> vector<8x512xf32>
    %c13 = arith.constant 13 : index
    %c0_48 = arith.constant 0 : index
    %c0_49 = arith.constant 0 : index
    %91 = vector.load %arg5[%c13, %c0_48, %c0_49] : memref<25x8x512xf32, #tpu.memory_space<vmem>>, vector<1x8x512xf32>
    %92 = vector.shape_cast %91 : vector<1x8x512xf32> to vector<8x512xf32>
    %93 = arith.mulf %90, %92 : vector<8x512xf32>
    %94 = arith.addf %89, %93 : vector<8x512xf32>
    %c448_i32_50 = arith.constant 448 : i32
    %95 = tpu.dynamic_rotate %17 by %c448_i32_50 dim 1 : vector<8x512xf32>, i32 -> vector<8x512xf32>
    %c14 = arith.constant 14 : index
    %c0_51 = arith.constant 0 : index
    %c0_52 = arith.constant 0 : index
    %96 = vector.load %arg5[%c14, %c0_51, %c0_52] : memref<25x8x512xf32, #tpu.memory_space<vmem>>, vector<1x8x512xf32>
    %97 = vector.shape_cast %96 : vector<1x8x512xf32> to vector<8x512xf32>
    %98 = arith.mulf %95, %97 : vector<8x512xf32>
    %99 = arith.addf %94, %98 : vector<8x512xf32>
    %c1_i32_53 = arith.constant 1 : i32
    %100 = vector.broadcast %c1_i32_53 : i32 to vector<8x512xi32>
    %101 = arith.cmpi slt, %1, %100 : vector<8x512xi32>
    %102 = arith.select %101, %19, %17 : vector<8x512xi1>, vector<8x512xf32>
    %c7_i32_54 = arith.constant 7 : i32
    %103 = tpu.dynamic_rotate %102 by %c7_i32_54 dim 0 : vector<8x512xf32>, i32 -> vector<8x512xf32>
    %c64_i32_55 = arith.constant 64 : i32
    %104 = tpu.dynamic_rotate %103 by %c64_i32_55 dim 1 : vector<8x512xf32>, i32 -> vector<8x512xf32>
    %c15 = arith.constant 15 : index
    %c0_56 = arith.constant 0 : index
    %c0_57 = arith.constant 0 : index
    %105 = vector.load %arg5[%c15, %c0_56, %c0_57] : memref<25x8x512xf32, #tpu.memory_space<vmem>>, vector<1x8x512xf32>
    %106 = vector.shape_cast %105 : vector<1x8x512xf32> to vector<8x512xf32>
    %107 = arith.mulf %104, %106 : vector<8x512xf32>
    %108 = arith.addf %99, %107 : vector<8x512xf32>
    %c32_i32_58 = arith.constant 32 : i32
    %109 = tpu.dynamic_rotate %103 by %c32_i32_58 dim 1 : vector<8x512xf32>, i32 -> vector<8x512xf32>
    %c16 = arith.constant 16 : index
    %c0_59 = arith.constant 0 : index
    %c0_60 = arith.constant 0 : index
    %110 = vector.load %arg5[%c16, %c0_59, %c0_60] : memref<25x8x512xf32, #tpu.memory_space<vmem>>, vector<1x8x512xf32>
    %111 = vector.shape_cast %110 : vector<1x8x512xf32> to vector<8x512xf32>
    %112 = arith.mulf %109, %111 : vector<8x512xf32>
    %113 = arith.addf %108, %112 : vector<8x512xf32>
    %c17 = arith.constant 17 : index
    %c0_61 = arith.constant 0 : index
    %c0_62 = arith.constant 0 : index
    %114 = vector.load %arg5[%c17, %c0_61, %c0_62] : memref<25x8x512xf32, #tpu.memory_space<vmem>>, vector<1x8x512xf32>
    %115 = vector.shape_cast %114 : vector<1x8x512xf32> to vector<8x512xf32>
    %116 = arith.mulf %103, %115 : vector<8x512xf32>
    %117 = arith.addf %113, %116 : vector<8x512xf32>
    %c480_i32_63 = arith.constant 480 : i32
    %118 = tpu.dynamic_rotate %103 by %c480_i32_63 dim 1 : vector<8x512xf32>, i32 -> vector<8x512xf32>
    %c18 = arith.constant 18 : index
    %c0_64 = arith.constant 0 : index
    %c0_65 = arith.constant 0 : index
    %119 = vector.load %arg5[%c18, %c0_64, %c0_65] : memref<25x8x512xf32, #tpu.memory_space<vmem>>, vector<1x8x512xf32>
    %120 = vector.shape_cast %119 : vector<1x8x512xf32> to vector<8x512xf32>
    %121 = arith.mulf %118, %120 : vector<8x512xf32>
    %122 = arith.addf %117, %121 : vector<8x512xf32>
    %c448_i32_66 = arith.constant 448 : i32
    %123 = tpu.dynamic_rotate %103 by %c448_i32_66 dim 1 : vector<8x512xf32>, i32 -> vector<8x512xf32>
    %c19 = arith.constant 19 : index
    %c0_67 = arith.constant 0 : index
    %c0_68 = arith.constant 0 : index
    %124 = vector.load %arg5[%c19, %c0_67, %c0_68] : memref<25x8x512xf32, #tpu.memory_space<vmem>>, vector<1x8x512xf32>
    %125 = vector.shape_cast %124 : vector<1x8x512xf32> to vector<8x512xf32>
    %126 = arith.mulf %123, %125 : vector<8x512xf32>
    %127 = arith.addf %122, %126 : vector<8x512xf32>
    %c2_i32_69 = arith.constant 2 : i32
    %128 = vector.broadcast %c2_i32_69 : i32 to vector<8x512xi32>
    %129 = arith.cmpi slt, %1, %128 : vector<8x512xi32>
    %130 = arith.select %129, %19, %17 : vector<8x512xi1>, vector<8x512xf32>
    %c6_i32_70 = arith.constant 6 : i32
    %131 = tpu.dynamic_rotate %130 by %c6_i32_70 dim 0 : vector<8x512xf32>, i32 -> vector<8x512xf32>
    %c64_i32_71 = arith.constant 64 : i32
    %132 = tpu.dynamic_rotate %131 by %c64_i32_71 dim 1 : vector<8x512xf32>, i32 -> vector<8x512xf32>
    %c20 = arith.constant 20 : index
    %c0_72 = arith.constant 0 : index
    %c0_73 = arith.constant 0 : index
    %133 = vector.load %arg5[%c20, %c0_72, %c0_73] : memref<25x8x512xf32, #tpu.memory_space<vmem>>, vector<1x8x512xf32>
    %134 = vector.shape_cast %133 : vector<1x8x512xf32> to vector<8x512xf32>
    %135 = arith.mulf %132, %134 : vector<8x512xf32>
    %136 = arith.addf %127, %135 : vector<8x512xf32>
    %c32_i32_74 = arith.constant 32 : i32
    %137 = tpu.dynamic_rotate %131 by %c32_i32_74 dim 1 : vector<8x512xf32>, i32 -> vector<8x512xf32>
    %c21 = arith.constant 21 : index
    %c0_75 = arith.constant 0 : index
    %c0_76 = arith.constant 0 : index
    %138 = vector.load %arg5[%c21, %c0_75, %c0_76] : memref<25x8x512xf32, #tpu.memory_space<vmem>>, vector<1x8x512xf32>
    %139 = vector.shape_cast %138 : vector<1x8x512xf32> to vector<8x512xf32>
    %140 = arith.mulf %137, %139 : vector<8x512xf32>
    %141 = arith.addf %136, %140 : vector<8x512xf32>
    %c22 = arith.constant 22 : index
    %c0_77 = arith.constant 0 : index
    %c0_78 = arith.constant 0 : index
    %142 = vector.load %arg5[%c22, %c0_77, %c0_78] : memref<25x8x512xf32, #tpu.memory_space<vmem>>, vector<1x8x512xf32>
    %143 = vector.shape_cast %142 : vector<1x8x512xf32> to vector<8x512xf32>
    %144 = arith.mulf %131, %143 : vector<8x512xf32>
    %145 = arith.addf %141, %144 : vector<8x512xf32>
    %c480_i32_79 = arith.constant 480 : i32
    %146 = tpu.dynamic_rotate %131 by %c480_i32_79 dim 1 : vector<8x512xf32>, i32 -> vector<8x512xf32>
    %c23 = arith.constant 23 : index
    %c0_80 = arith.constant 0 : index
    %c0_81 = arith.constant 0 : index
    %147 = vector.load %arg5[%c23, %c0_80, %c0_81] : memref<25x8x512xf32, #tpu.memory_space<vmem>>, vector<1x8x512xf32>
    %148 = vector.shape_cast %147 : vector<1x8x512xf32> to vector<8x512xf32>
    %149 = arith.mulf %146, %148 : vector<8x512xf32>
    %150 = arith.addf %145, %149 : vector<8x512xf32>
    %c448_i32_82 = arith.constant 448 : i32
    %151 = tpu.dynamic_rotate %131 by %c448_i32_82 dim 1 : vector<8x512xf32>, i32 -> vector<8x512xf32>
    %c24 = arith.constant 24 : index
    %c0_83 = arith.constant 0 : index
    %c0_84 = arith.constant 0 : index
    %152 = vector.load %arg5[%c24, %c0_83, %c0_84] : memref<25x8x512xf32, #tpu.memory_space<vmem>>, vector<1x8x512xf32>
    %153 = vector.shape_cast %152 : vector<1x8x512xf32> to vector<8x512xf32>
    %154 = arith.mulf %151, %153 : vector<8x512xf32>
    %155 = arith.addf %150, %154 : vector<8x512xf32>
    %cst = arith.constant 5.000000e-01 : f32
    %156 = vector.broadcast %cst : f32 to vector<8x512xf32>
    %157 = arith.mulf %156, %155 : vector<8x512xf32>
    %cst_85 = arith.constant 0.707106769 : f32
    %158 = vector.broadcast %cst_85 : f32 to vector<8x512xf32>
    %159 = arith.mulf %155, %158 : vector<8x512xf32>
    %160 = math.erf %159 : vector<8x512xf32>
    %cst_86 = arith.constant 1.000000e+00 : f32
    %161 = vector.broadcast %cst_86 : f32 to vector<8x512xf32>
    %162 = arith.addf %161, %160 : vector<8x512xf32>
    %163 = arith.mulf %157, %162 : vector<8x512xf32>
    %c0_87 = arith.constant 0 : index
    %c0_88 = arith.constant 0 : index
    %c0_89 = arith.constant 0 : index
    %164 = vector.load %arg7[%c0_87, %c0_88, %c0_89] : memref<1x16x512xf32, #tpu.memory_space<vmem>>, vector<1x8x512xf32>
    %165 = vector.shape_cast %164 : vector<1x8x512xf32> to vector<8x512xf32>
    %166 = vector.shape_cast %163 : vector<8x512xf32> to vector<1x8x512xf32>
    tpu.vector_store %arg7[%c0_87, %c0_88, %c0_89], %166 {strides = array<i32>} : memref<1x16x512xf32, #tpu.memory_space<vmem>>, vector<1x8x512xf32>,
    %c0_90 = arith.constant 0 : index
    %c8_91 = arith.constant 8 : index
    %c0_92 = arith.constant 0 : index
    %167 = vector.load %arg2[%c0_90, %c8_91, %c0_92] : memref<1x16x512xf32, #tpu.memory_space<vmem>>, vector<1x8x512xf32>
    %168 = vector.shape_cast %167 : vector<1x8x512xf32> to vector<8x512xf32>
    %c0_93 = arith.constant 0 : index
    %c0_94 = arith.constant 0 : index
    %c0_95 = arith.constant 0 : index
    %169 = vector.load %arg2[%c0_93, %c0_94, %c0_95] : memref<1x16x512xf32, #tpu.memory_space<vmem>>, vector<1x8x512xf32>
    %170 = vector.shape_cast %169 : vector<1x8x512xf32> to vector<8x512xf32>
    %c6_i32_96 = arith.constant 6 : i32
    %171 = vector.broadcast %c6_i32_96 : i32 to vector<8x512xi32>
    %172 = arith.cmpi sge, %1, %171 : vector<8x512xi32>
    %173 = arith.select %172, %170, %168 : vector<8x512xi1>, vector<8x512xf32>
    %c2_i32_97 = arith.constant 2 : i32
    %174 = tpu.dynamic_rotate %173 by %c2_i32_97 dim 0 : vector<8x512xf32>, i32 -> vector<8x512xf32>
    %c64_i32_98 = arith.constant 64 : i32
    %175 = tpu.dynamic_rotate %174 by %c64_i32_98 dim 1 : vector<8x512xf32>, i32 -> vector<8x512xf32>
    %c0_99 = arith.constant 0 : index
    %c0_100 = arith.constant 0 : index
    %c0_101 = arith.constant 0 : index
    %176 = vector.load %arg5[%c0_99, %c0_100, %c0_101] : memref<25x8x512xf32, #tpu.memory_space<vmem>>, vector<1x8x512xf32>
    %177 = vector.shape_cast %176 : vector<1x8x512xf32> to vector<8x512xf32>
    %178 = arith.mulf %175, %177 : vector<8x512xf32>
    %179 = arith.addf %0, %178 : vector<8x512xf32>
    %c32_i32_102 = arith.constant 32 : i32
    %180 = tpu.dynamic_rotate %174 by %c32_i32_102 dim 1 : vector<8x512xf32>, i32 -> vector<8x512xf32>
    %c1_103 = arith.constant 1 : index
    %c0_104 = arith.constant 0 : index
    %c0_105 = arith.constant 0 : index
    %181 = vector.load %arg5[%c1_103, %c0_104, %c0_105] : memref<25x8x512xf32, #tpu.memory_space<vmem>>, vector<1x8x512xf32>
    %182 = vector.shape_cast %181 : vector<1x8x512xf32> to vector<8x512xf32>
    %183 = arith.mulf %180, %182 : vector<8x512xf32>
    %184 = arith.addf %179, %183 : vector<8x512xf32>
    %c2_106 = arith.constant 2 : index
    %c0_107 = arith.constant 0 : index
    %c0_108 = arith.constant 0 : index
    %185 = vector.load %arg5[%c2_106, %c0_107, %c0_108] : memref<25x8x512xf32, #tpu.memory_space<vmem>>, vector<1x8x512xf32>
    %186 = vector.shape_cast %185 : vector<1x8x512xf32> to vector<8x512xf32>
    %187 = arith.mulf %174, %186 : vector<8x512xf32>
    %188 = arith.addf %184, %187 : vector<8x512xf32>
    %c480_i32_109 = arith.constant 480 : i32
    %189 = tpu.dynamic_rotate %174 by %c480_i32_109 dim 1 : vector<8x512xf32>, i32 -> vector<8x512xf32>
    %c3_110 = arith.constant 3 : index
    %c0_111 = arith.constant 0 : index
    %c0_112 = arith.constant 0 : index
    %190 = vector.load %arg5[%c3_110, %c0_111, %c0_112] : memref<25x8x512xf32, #tpu.memory_space<vmem>>, vector<1x8x512xf32>
    %191 = vector.shape_cast %190 : vector<1x8x512xf32> to vector<8x512xf32>
    %192 = arith.mulf %189, %191 : vector<8x512xf32>
    %193 = arith.addf %188, %192 : vector<8x512xf32>
    %c448_i32_113 = arith.constant 448 : i32
    %194 = tpu.dynamic_rotate %174 by %c448_i32_113 dim 1 : vector<8x512xf32>, i32 -> vector<8x512xf32>
    %c4_114 = arith.constant 4 : index
    %c0_115 = arith.constant 0 : index
    %c0_116 = arith.constant 0 : index
    %195 = vector.load %arg5[%c4_114, %c0_115, %c0_116] : memref<25x8x512xf32, #tpu.memory_space<vmem>>, vector<1x8x512xf32>
    %196 = vector.shape_cast %195 : vector<1x8x512xf32> to vector<8x512xf32>
    %197 = arith.mulf %194, %196 : vector<8x512xf32>
    %198 = arith.addf %193, %197 : vector<8x512xf32>
    %c7_i32_117 = arith.constant 7 : i32
    %199 = vector.broadcast %c7_i32_117 : i32 to vector<8x512xi32>
    %200 = arith.cmpi sge, %1, %199 : vector<8x512xi32>
    %201 = arith.select %200, %170, %168 : vector<8x512xi1>, vector<8x512xf32>
    %c1_i32_118 = arith.constant 1 : i32
    %202 = tpu.dynamic_rotate %201 by %c1_i32_118 dim 0 : vector<8x512xf32>, i32 -> vector<8x512xf32>
    %c64_i32_119 = arith.constant 64 : i32
    %203 = tpu.dynamic_rotate %202 by %c64_i32_119 dim 1 : vector<8x512xf32>, i32 -> vector<8x512xf32>
    %c5_120 = arith.constant 5 : index
    %c0_121 = arith.constant 0 : index
    %c0_122 = arith.constant 0 : index
    %204 = vector.load %arg5[%c5_120, %c0_121, %c0_122] : memref<25x8x512xf32, #tpu.memory_space<vmem>>, vector<1x8x512xf32>
    %205 = vector.shape_cast %204 : vector<1x8x512xf32> to vector<8x512xf32>
    %206 = arith.mulf %203, %205 : vector<8x512xf32>
    %207 = arith.addf %198, %206 : vector<8x512xf32>
    %c32_i32_123 = arith.constant 32 : i32
    %208 = tpu.dynamic_rotate %202 by %c32_i32_123 dim 1 : vector<8x512xf32>, i32 -> vector<8x512xf32>
    %c6_124 = arith.constant 6 : index
    %c0_125 = arith.constant 0 : index
    %c0_126 = arith.constant 0 : index
    %209 = vector.load %arg5[%c6_124, %c0_125, %c0_126] : memref<25x8x512xf32, #tpu.memory_space<vmem>>, vector<1x8x512xf32>
    %210 = vector.shape_cast %209 : vector<1x8x512xf32> to vector<8x512xf32>
    %211 = arith.mulf %208, %210 : vector<8x512xf32>
    %212 = arith.addf %207, %211 : vector<8x512xf32>
    %c7_127 = arith.constant 7 : index
    %c0_128 = arith.constant 0 : index
    %c0_129 = arith.constant 0 : index
    %213 = vector.load %arg5[%c7_127, %c0_128, %c0_129] : memref<25x8x512xf32, #tpu.memory_space<vmem>>, vector<1x8x512xf32>
    %214 = vector.shape_cast %213 : vector<1x8x512xf32> to vector<8x512xf32>
    %215 = arith.mulf %202, %214 : vector<8x512xf32>
    %216 = arith.addf %212, %215 : vector<8x512xf32>
    %c480_i32_130 = arith.constant 480 : i32
    %217 = tpu.dynamic_rotate %202 by %c480_i32_130 dim 1 : vector<8x512xf32>, i32 -> vector<8x512xf32>
    %c8_131 = arith.constant 8 : index
    %c0_132 = arith.constant 0 : index
    %c0_133 = arith.constant 0 : index
    %218 = vector.load %arg5[%c8_131, %c0_132, %c0_133] : memref<25x8x512xf32, #tpu.memory_space<vmem>>, vector<1x8x512xf32>
    %219 = vector.shape_cast %218 : vector<1x8x512xf32> to vector<8x512xf32>
    %220 = arith.mulf %217, %219 : vector<8x512xf32>
    %221 = arith.addf %216, %220 : vector<8x512xf32>
    %c448_i32_134 = arith.constant 448 : i32
    %222 = tpu.dynamic_rotate %202 by %c448_i32_134 dim 1 : vector<8x512xf32>, i32 -> vector<8x512xf32>
    %c9_135 = arith.constant 9 : index
    %c0_136 = arith.constant 0 : index
    %c0_137 = arith.constant 0 : index
    %223 = vector.load %arg5[%c9_135, %c0_136, %c0_137] : memref<25x8x512xf32, #tpu.memory_space<vmem>>, vector<1x8x512xf32>
    %224 = vector.shape_cast %223 : vector<1x8x512xf32> to vector<8x512xf32>
    %225 = arith.mulf %222, %224 : vector<8x512xf32>
    %226 = arith.addf %221, %225 : vector<8x512xf32>
    %c64_i32_138 = arith.constant 64 : i32
    %227 = tpu.dynamic_rotate %168 by %c64_i32_138 dim 1 : vector<8x512xf32>, i32 -> vector<8x512xf32>
    %c10_139 = arith.constant 10 : index
    %c0_140 = arith.constant 0 : index
    %c0_141 = arith.constant 0 : index
    %228 = vector.load %arg5[%c10_139, %c0_140, %c0_141] : memref<25x8x512xf32, #tpu.memory_space<vmem>>, vector<1x8x512xf32>
    %229 = vector.shape_cast %228 : vector<1x8x512xf32> to vector<8x512xf32>
    %230 = arith.mulf %227, %229 : vector<8x512xf32>
    %231 = arith.addf %226, %230 : vector<8x512xf32>
    %c32_i32_142 = arith.constant 32 : i32
    %232 = tpu.dynamic_rotate %168 by %c32_i32_142 dim 1 : vector<8x512xf32>, i32 -> vector<8x512xf32>
    %c11_143 = arith.constant 11 : index
    %c0_144 = arith.constant 0 : index
    %c0_145 = arith.constant 0 : index
    %233 = vector.load %arg5[%c11_143, %c0_144, %c0_145] : memref<25x8x512xf32, #tpu.memory_space<vmem>>, vector<1x8x512xf32>
    %234 = vector.shape_cast %233 : vector<1x8x512xf32> to vector<8x512xf32>
    %235 = arith.mulf %232, %234 : vector<8x512xf32>
    %236 = arith.addf %231, %235 : vector<8x512xf32>
    %c12_146 = arith.constant 12 : index
    %c0_147 = arith.constant 0 : index
    %c0_148 = arith.constant 0 : index
    %237 = vector.load %arg5[%c12_146, %c0_147, %c0_148] : memref<25x8x512xf32, #tpu.memory_space<vmem>>, vector<1x8x512xf32>
    %238 = vector.shape_cast %237 : vector<1x8x512xf32> to vector<8x512xf32>
    %239 = arith.mulf %168, %238 : vector<8x512xf32>
    %240 = arith.addf %236, %239 : vector<8x512xf32>
    %c480_i32_149 = arith.constant 480 : i32
    %241 = tpu.dynamic_rotate %168 by %c480_i32_149 dim 1 : vector<8x512xf32>, i32 -> vector<8x512xf32>
    %c13_150 = arith.constant 13 : index
    %c0_151 = arith.constant 0 : index
    %c0_152 = arith.constant 0 : index
    %242 = vector.load %arg5[%c13_150, %c0_151, %c0_152] : memref<25x8x512xf32, #tpu.memory_space<vmem>>, vector<1x8x512xf32>
    %243 = vector.shape_cast %242 : vector<1x8x512xf32> to vector<8x512xf32>
    %244 = arith.mulf %241, %243 : vector<8x512xf32>
    %245 = arith.addf %240, %244 : vector<8x512xf32>
    %c448_i32_153 = arith.constant 448 : i32
    %246 = tpu.dynamic_rotate %168 by %c448_i32_153 dim 1 : vector<8x512xf32>, i32 -> vector<8x512xf32>
    %c14_154 = arith.constant 14 : index
    %c0_155 = arith.constant 0 : index
    %c0_156 = arith.constant 0 : index
    %247 = vector.load %arg5[%c14_154, %c0_155, %c0_156] : memref<25x8x512xf32, #tpu.memory_space<vmem>>, vector<1x8x512xf32>
    %248 = vector.shape_cast %247 : vector<1x8x512xf32> to vector<8x512xf32>
    %249 = arith.mulf %246, %248 : vector<8x512xf32>
    %250 = arith.addf %245, %249 : vector<8x512xf32>
    %c1_i32_157 = arith.constant 1 : i32
    %251 = vector.broadcast %c1_i32_157 : i32 to vector<8x512xi32>
    %252 = arith.cmpi slt, %1, %251 : vector<8x512xi32>
    %253 = arith.select %252, %15, %168 : vector<8x512xi1>, vector<8x512xf32>
    %c7_i32_158 = arith.constant 7 : i32
    %254 = tpu.dynamic_rotate %253 by %c7_i32_158 dim 0 : vector<8x512xf32>, i32 -> vector<8x512xf32>
    %c64_i32_159 = arith.constant 64 : i32
    %255 = tpu.dynamic_rotate %254 by %c64_i32_159 dim 1 : vector<8x512xf32>, i32 -> vector<8x512xf32>
    %c15_160 = arith.constant 15 : index
    %c0_161 = arith.constant 0 : index
    %c0_162 = arith.constant 0 : index
    %256 = vector.load %arg5[%c15_160, %c0_161, %c0_162] : memref<25x8x512xf32, #tpu.memory_space<vmem>>, vector<1x8x512xf32>
    %257 = vector.shape_cast %256 : vector<1x8x512xf32> to vector<8x512xf32>
    %258 = arith.mulf %255, %257 : vector<8x512xf32>
    %259 = arith.addf %250, %258 : vector<8x512xf32>
    %c32_i32_163 = arith.constant 32 : i32
    %260 = tpu.dynamic_rotate %254 by %c32_i32_163 dim 1 : vector<8x512xf32>, i32 -> vector<8x512xf32>
    %c16_164 = arith.constant 16 : index
    %c0_165 = arith.constant 0 : index
    %c0_166 = arith.constant 0 : index
    %261 = vector.load %arg5[%c16_164, %c0_165, %c0_166] : memref<25x8x512xf32, #tpu.memory_space<vmem>>, vector<1x8x512xf32>
    %262 = vector.shape_cast %261 : vector<1x8x512xf32> to vector<8x512xf32>
    %263 = arith.mulf %260, %262 : vector<8x512xf32>
    %264 = arith.addf %259, %263 : vector<8x512xf32>
    %c17_167 = arith.constant 17 : index
    %c0_168 = arith.constant 0 : index
    %c0_169 = arith.constant 0 : index
    %265 = vector.load %arg5[%c17_167, %c0_168, %c0_169] : memref<25x8x512xf32, #tpu.memory_space<vmem>>, vector<1x8x512xf32>
    %266 = vector.shape_cast %265 : vector<1x8x512xf32> to vector<8x512xf32>
    %267 = arith.mulf %254, %266 : vector<8x512xf32>
    %268 = arith.addf %264, %267 : vector<8x512xf32>
    %c480_i32_170 = arith.constant 480 : i32
    %269 = tpu.dynamic_rotate %254 by %c480_i32_170 dim 1 : vector<8x512xf32>, i32 -> vector<8x512xf32>
    %c18_171 = arith.constant 18 : index
    %c0_172 = arith.constant 0 : index
    %c0_173 = arith.constant 0 : index
    %270 = vector.load %arg5[%c18_171, %c0_172, %c0_173] : memref<25x8x512xf32, #tpu.memory_space<vmem>>, vector<1x8x512xf32>
    %271 = vector.shape_cast %270 : vector<1x8x512xf32> to vector<8x512xf32>
    %272 = arith.mulf %269, %271 : vector<8x512xf32>
    %273 = arith.addf %268, %272 : vector<8x512xf32>
    %c448_i32_174 = arith.constant 448 : i32
    %274 = tpu.dynamic_rotate %254 by %c448_i32_174 dim 1 : vector<8x512xf32>, i32 -> vector<8x512xf32>
    %c19_175 = arith.constant 19 : index
    %c0_176 = arith.constant 0 : index
    %c0_177 = arith.constant 0 : index
    %275 = vector.load %arg5[%c19_175, %c0_176, %c0_177] : memref<25x8x512xf32, #tpu.memory_space<vmem>>, vector<1x8x512xf32>
    %276 = vector.shape_cast %275 : vector<1x8x512xf32> to vector<8x512xf32>
    %277 = arith.mulf %274, %276 : vector<8x512xf32>
    %278 = arith.addf %273, %277 : vector<8x512xf32>
    %c2_i32_178 = arith.constant 2 : i32
    %279 = vector.broadcast %c2_i32_178 : i32 to vector<8x512xi32>
    %280 = arith.cmpi slt, %1, %279 : vector<8x512xi32>
    %281 = arith.select %280, %15, %168 : vector<8x512xi1>, vector<8x512xf32>
    %c6_i32_179 = arith.constant 6 : i32
    %282 = tpu.dynamic_rotate %281 by %c6_i32_179 dim 0 : vector<8x512xf32>, i32 -> vector<8x512xf32>
    %c64_i32_180 = arith.constant 64 : i32
    %283 = tpu.dynamic_rotate %282 by %c64_i32_180 dim 1 : vector<8x512xf32>, i32 -> vector<8x512xf32>
    %c20_181 = arith.constant 20 : index
    %c0_182 = arith.constant 0 : index
    %c0_183 = arith.constant 0 : index
    %284 = vector.load %arg5[%c20_181, %c0_182, %c0_183] : memref<25x8x512xf32, #tpu.memory_space<vmem>>, vector<1x8x512xf32>
    %285 = vector.shape_cast %284 : vector<1x8x512xf32> to vector<8x512xf32>
    %286 = arith.mulf %283, %285 : vector<8x512xf32>
    %287 = arith.addf %278, %286 : vector<8x512xf32>
    %c32_i32_184 = arith.constant 32 : i32
    %288 = tpu.dynamic_rotate %282 by %c32_i32_184 dim 1 : vector<8x512xf32>, i32 -> vector<8x512xf32>
    %c21_185 = arith.constant 21 : index
    %c0_186 = arith.constant 0 : index
    %c0_187 = arith.constant 0 : index
    %289 = vector.load %arg5[%c21_185, %c0_186, %c0_187] : memref<25x8x512xf32, #tpu.memory_space<vmem>>, vector<1x8x512xf32>
    %290 = vector.shape_cast %289 : vector<1x8x512xf32> to vector<8x512xf32>
    %291 = arith.mulf %288, %290 : vector<8x512xf32>
    %292 = arith.addf %287, %291 : vector<8x512xf32>
    %c22_188 = arith.constant 22 : index
    %c0_189 = arith.constant 0 : index
    %c0_190 = arith.constant 0 : index
    %293 = vector.load %arg5[%c22_188, %c0_189, %c0_190] : memref<25x8x512xf32, #tpu.memory_space<vmem>>, vector<1x8x512xf32>
    %294 = vector.shape_cast %293 : vector<1x8x512xf32> to vector<8x512xf32>
    %295 = arith.mulf %282, %294 : vector<8x512xf32>
    %296 = arith.addf %292, %295 : vector<8x512xf32>
    %c480_i32_191 = arith.constant 480 : i32
    %297 = tpu.dynamic_rotate %282 by %c480_i32_191 dim 1 : vector<8x512xf32>, i32 -> vector<8x512xf32>
    %c23_192 = arith.constant 23 : index
    %c0_193 = arith.constant 0 : index
    %c0_194 = arith.constant 0 : index
    %298 = vector.load %arg5[%c23_192, %c0_193, %c0_194] : memref<25x8x512xf32, #tpu.memory_space<vmem>>, vector<1x8x512xf32>
    %299 = vector.shape_cast %298 : vector<1x8x512xf32> to vector<8x512xf32>
    %300 = arith.mulf %297, %299 : vector<8x512xf32>
    %301 = arith.addf %296, %300 : vector<8x512xf32>
    %c448_i32_195 = arith.constant 448 : i32
    %302 = tpu.dynamic_rotate %282 by %c448_i32_195 dim 1 : vector<8x512xf32>, i32 -> vector<8x512xf32>
    %c24_196 = arith.constant 24 : index
    %c0_197 = arith.constant 0 : index
    %c0_198 = arith.constant 0 : index
    %303 = vector.load %arg5[%c24_196, %c0_197, %c0_198] : memref<25x8x512xf32, #tpu.memory_space<vmem>>, vector<1x8x512xf32>
    %304 = vector.shape_cast %303 : vector<1x8x512xf32> to vector<8x512xf32>
    %305 = arith.mulf %302, %304 : vector<8x512xf32>
    %306 = arith.addf %301, %305 : vector<8x512xf32>
    %cst_199 = arith.constant 5.000000e-01 : f32
    %307 = vector.broadcast %cst_199 : f32 to vector<8x512xf32>
    %308 = arith.mulf %307, %306 : vector<8x512xf32>
    %cst_200 = arith.constant 0.707106769 : f32
    %309 = vector.broadcast %cst_200 : f32 to vector<8x512xf32>
    %310 = arith.mulf %306, %309 : vector<8x512xf32>
    %311 = math.erf %310 : vector<8x512xf32>
    %cst_201 = arith.constant 1.000000e+00 : f32
    %312 = vector.broadcast %cst_201 : f32 to vector<8x512xf32>
    %313 = arith.addf %312, %311 : vector<8x512xf32>
    %314 = arith.mulf %308, %313 : vector<8x512xf32>
    %c0_202 = arith.constant 0 : index
    %c8_203 = arith.constant 8 : index
    %c0_204 = arith.constant 0 : index
    %315 = vector.load %arg7[%c0_202, %c8_203, %c0_204] : memref<1x16x512xf32, #tpu.memory_space<vmem>>, vector<1x8x512xf32>
    %316 = vector.shape_cast %315 : vector<1x8x512xf32> to vector<8x512xf32>
    %317 = vector.shape_cast %314 : vector<8x512xf32> to vector<1x8x512xf32>
    tpu.vector_store %arg7[%c0_202, %c8_203, %c0_204], %317 {strides = array<i32>} : memref<1x16x512xf32, #tpu.memory_space<vmem>>, vector<1x8x512xf32>,
    return
  }
  func.func @transform_0(%arg0: i32, %arg1: i32) -> (i32, i32, i32) {
    %c0_i32 = arith.constant 0 : i32
    %c0_i32_0 = arith.constant 0 : i32
    return %arg0, %arg1, %c0_i32 : i32, i32, i32
  }
  func.func @transform_1(%arg0: i32, %arg1: i32) -> (i32, i32, i32) {
    %c2_i32 = arith.constant 2 : i32
    %0 = arith.muli %arg1, %c2_i32 : i32
    %c1_i32 = arith.constant 1 : i32
    %1 = arith.subi %0, %c1_i32 : i32
    %c0_i32 = arith.constant 0 : i32
    %2 = arith.maxsi %1, %c0_i32 : i32
    %c0_i32_0 = arith.constant 0 : i32
    %c0_i32_1 = arith.constant 0 : i32
    return %arg0, %2, %c0_i32_0 : i32, i32, i32
  }
  func.func @transform_2(%arg0: i32, %arg1: i32) -> (i32, i32, i32) {
    %c1_i32 = arith.constant 1 : i32
    %0 = arith.addi %arg1, %c1_i32 : i32
    %c2_i32 = arith.constant 2 : i32
    %1 = arith.muli %0, %c2_i32 : i32
    %c1_i32_0 = arith.constant 1 : i32
    %2 = arith.minsi %1, %c1_i32_0 : i32
    %c0_i32 = arith.constant 0 : i32
    %c0_i32_1 = arith.constant 0 : i32
    return %arg0, %2, %c0_i32 : i32, i32, i32
  }
  func.func @transform_3(%arg0: i32, %arg1: i32) -> (i32, i32, i32) {
    %c0_i32 = arith.constant 0 : i32
    %c0_i32_0 = arith.constant 0 : i32
    %c0_i32_1 = arith.constant 0 : i32
    %c0_i32_2 = arith.constant 0 : i32
    return %c0_i32, %c0_i32_0, %c0_i32_1 : i32, i32, i32
  }
  func.func @transform_4(%arg0: i32, %arg1: i32) -> (i32, i32) {
    %c0_i32 = arith.constant 0 : i32
    %c0_i32_0 = arith.constant 0 : i32
    %c0_i32_1 = arith.constant 0 : i32
    return %c0_i32, %c0_i32_0 : i32, i32
  }
  func.func @transform_5(%arg0: i32, %arg1: i32) -> (i32, i32, i32) {
    %c0_i32 = arith.constant 0 : i32
    %c0_i32_0 = arith.constant 0 : i32
    return %arg0, %arg1, %c0_i32 : i32, i32, i32
  }
}

</mosaic_0001>

<llo_original>
// kernel: tpu_custom_call.1
$region0: #{tpu_custom_call.1}
  #allocation0 [shape = 'u32[]', space=smem, size = 0x4, offset = 0x4, fixed_abs, tag = 'smem constant byte address 0x4 - core index']
  #allocation1 [shape = 'u32[144,128]{1,0:T(1,128)}', space=vmem, size = 0x12000, scoped, tag = 'internal scratch']
  %s0 = inlined_call_operand.hbm [shape: f32[2,16,512], index: 0, kind: input, shape index: {}]
  %s1 = inlined_call_operand.hbm [shape: f32[2,16,512], index: 1, kind: input, shape index: {}]
  %s2 = inlined_call_operand.hbm [shape: f32[2,16,512], index: 2, kind: input, shape index: {}]
  %s3 = inlined_call_operand.hbm [shape: f32[25,8,512], index: 3, kind: input, shape index: {}]
  %s4 = inlined_call_operand.hbm [shape: f32[8,512], index: 4, kind: input, shape index: {}]
  %s5 = inlined_call_operand.hbm [shape: f32[2,16,512], index: 5, kind: output, shape index: {}]
  %s6 = sld [smem:[#allocation0]]
  $region73: #{tpu_custom_call.1} parent=0
    _
  %s8 = ssub.s32 1, %s6
  %s9 = scalar_select 0, %s8, %s6
  $region1: #{tpu_custom_call.1} parent=0
    #allocation2 [shape = 'u8[65536]{0}', space=vmem, size = 0x10000, scoped, tag = 'input window, operand 0']
    #allocation3 [shape = 's32[2]{0}', space=sflag, size = 0x8, scoped, tag = 'scoped memory for tpu_custom_call.1']
    #allocation4 [shape = 's32[2]{0}', space=sflag, size = 0x8, scoped, tag = 'scoped memory for tpu_custom_call.1']
    #allocation5 [shape = 'u8[32768]{0}', space=vmem, size = 0x8000, scoped, tag = 'input window, operand 1']
    #allocation6 [shape = 's32[2]{0}', space=sflag, size = 0x8, scoped, tag = 'scoped memory for tpu_custom_call.1']
    #allocation7 [shape = 'u8[32768]{0}', space=vmem, size = 0x8000, scoped, tag = 'input window, operand 2']
    #allocation8 [shape = 'u8[409600]{0}', space=vmem, size = 0x64000, scoped, tag = 'input window, operand 3, single buffered']
    #allocation9 [shape = 's32[1]{0}', space=sflag, size = 0x4, scoped, tag = 'scoped memory for tpu_custom_call.1']
    #allocation10 [shape = 'u8[16384]{0}', space=vmem, size = 0x4000, scoped, tag = 'input window, operand 4, single buffered']
    #allocation11 [shape = 'u8[65536]{0}', space=vmem, size = 0x10000, scoped, tag = 'output window, operand 0']
    %10 = vsyncpa [#allocation3], 0
    %s11 = scalar_lea.sflag [#allocation3], 1
    %12 = vsyncpa %s11, 0
    %13 = vsyncpa [#allocation6], 0
    %s14 = scalar_lea.sflag [#allocation6], 1
    %15 = vsyncpa %s14, 0
    %16 = vsyncpa [#allocation9], 0
    %17 = vsyncpa [#allocation4], 0
    %s18 = scalar_lea.sflag [#allocation4], 1
    %19 = vsyncpa %s18, 0
    loop: start=0, step=1, limit=4
    $region2: #{tpu_custom_call.1} parent=1 // loop_pre_header
      _
    $region3: #{tpu_custom_call.1} parent=1 // loop_header
      %s21 = sphi 0, %s25
      %p22 = scmp.ge.s32.totalorder %s21, 4
      %s28 = sphi 0, %s40
      %s29 = sphi 0, %s36
      %s30 = sphi 0, %s28
      %s31 = sphi 0, %s29
      %s32 = sphi 0, %s30
      %s33 = sphi 0, %s31
      %s45 = sphi 0, %s47
      %s48 = sphi 0, %s45
      %s49 = sphi 0, %s48
      %s65 = sphi 0, %s49
      %s81 = sphi 0, %s83
      %s84 = sphi 0, %s81
      %s85 = sphi 0, %s84
      %s101 = sphi 0, %s85
      %s117 = sphi 0, %s119
      %s120 = sphi 0, %s117
      %s121 = sphi 0, %s120
      %s137 = sphi 0, %s121
      %s141 = sphi 0, %s141
      %s143 = sphi 0, %s141
      %s144 = sphi 0, %s143
      %s158 = sphi 0, %s144
      %s162 = sphi 0, %s162
      %s164 = sphi 0, %s162
      %s165 = sphi 0, %s164
      %s179 = sphi 0, %s165
      %s187 = sphi 0, %s189
      %s190 = sphi 0, %s187
      %s191 = sphi 0, %s190
      %s207 = sphi 0, %s191
    $region4: #{tpu_custom_call.1} parent=1 // loop_header_branch
      %24 = sbr.rel (%p22) target = $region8
    $region5: #{tpu_custom_call.1} parent=1 // loop_body
      %s26 = ssub.s32 %s21, 1
      %s27 = ssub.s32 %s21, 2
      %s34 = sadd.s32 1, %s29
      %p35 = scmp.ge.s32.totalorder %s34, 1
      %s36 = scalar_select %p35, 0, %s34
      %s37 = sadd.s32 1, %s28
      %s38 = scalar_select %p35, %s37, %s28
      %p39 = scmp.ge.s32.totalorder %s38, 2
      %s40 = scalar_select %p39, 0, %s38
      %s41 = ssub.s32 %s28, %s40
      %s42 = ssub.s32 %s29, %s36
      %s43 = sor.u32 %s41, %s42
      %p44 = scmp.eq.s32.totalorder %s43, 0
      %s46 = sadd.s32 %s45, 1
      %s47 = scalar_select %p44, %s45, %s46
      %p50 = pneg %p44
      %p51 = scmp.eq.s32.totalorder %s21, 1
      %p52 = por %p50, %p51
      %p53 = scmp.ne.s32.totalorder %s45, %s48
      %p54 = scmp.eq.s32.totalorder %s21, 0
      %p55 = por %p53, %p54
      %p56 = scmp.ne.s32.totalorder %s45, %s48
      %p57 = scmp.eq.s32.totalorder %s26, 1
      %p58 = por %p56, %p57
      %p59 = scmp.ne.s32.totalorder %s48, %s49
      %p60 = scmp.eq.s32.totalorder %s26, 0
      %p61 = por %p59, %p60
      %p62 = scmp.ne.s32.totalorder %s48, %s49
      %p63 = scmp.eq.s32.totalorder %s27, 1
      %p64 = por %p62, %p63
      %p66 = scmp.ne.s32.totalorder %s49, %s65
      %p67 = scmp.eq.s32.totalorder %s27, 0
      %p68 = por %p66, %p67
      %s69 = smul.u32 %s29, 2
      %s70 = ssub.s32 %s69, 1
      %p71 = scmp.gt.s32.totalorder %s70, 0
      %s72 = scalar_select %p71, %s70, 0
      %s73 = smul.u32 %s36, 2
      %s74 = ssub.s32 %s73, 1
      %p75 = scmp.gt.s32.totalorder %s74, 0
      %s76 = scalar_select %p75, %s74, 0
      %s77 = ssub.s32 %s28, %s40
      %s78 = ssub.s32 %s72, %s76
      %s79 = sor.u32 %s77, %s78
      %p80 = scmp.eq.s32.totalorder %s79, 0
      %s82 = sadd.s32 %s81, 1
      %s83 = scalar_select %p80, %s81, %s82
      %p86 = pneg %p80
      %p87 = scmp.eq.s32.totalorder %s21, 1
      %p88 = por %p86, %p87
      %p89 = scmp.ne.s32.totalorder %s81, %s84
      %p90 = scmp.eq.s32.totalorder %s21, 0
      %p91 = por %p89, %p90
      %p92 = scmp.ne.s32.totalorder %s81, %s84
      %p93 = scmp.eq.s32.totalorder %s26, 1
      %p94 = por %p92, %p93
      %p95 = scmp.ne.s32.totalorder %s84, %s85
      %p96 = scmp.eq.s32.totalorder %s26, 0
      %p97 = por %p95, %p96
      %p98 = scmp.ne.s32.totalorder %s84, %s85
      %p99 = scmp.eq.s32.totalorder %s27, 1
      %p100 = por %p98, %p99
      %p102 = scmp.ne.s32.totalorder %s85, %s101
      %p103 = scmp.eq.s32.totalorder %s27, 0
      %p104 = por %p102, %p103
      %s105 = sadd.s32 %s29, 1
      %s106 = smul.u32 %s105, 2
      %p107 = scmp.lt.s32.totalorder %s106, 1
      %s108 = scalar_select %p107, %s106, 1
      %s109 = sadd.s32 %s36, 1
      %s110 = smul.u32 %s109, 2
      %p111 = scmp.lt.s32.totalorder %s110, 1
      %s112 = scalar_select %p111, %s110, 1
      %s113 = ssub.s32 %s28, %s40
      %s114 = ssub.s32 %s108, %s112
      %s115 = sor.u32 %s113, %s114
      %p116 = scmp.eq.s32.totalorder %s115, 0
      %s118 = sadd.s32 %s117, 1
      %s119 = scalar_select %p116, %s117, %s118
      %p122 = pneg %p116
      %p123 = scmp.eq.s32.totalorder %s21, 1
      %p124 = por %p122, %p123
      %p125 = scmp.ne.s32.totalorder %s117, %s120
      %p126 = scmp.eq.s32.totalorder %s21, 0
      %p127 = por %p125, %p126
      %p128 = scmp.ne.s32.totalorder %s117, %s120
      %p129 = scmp.eq.s32.totalorder %s26, 1
      %p130 = por %p128, %p129
      %p131 = scmp.ne.s32.totalorder %s120, %s121
      %p132 = scmp.eq.s32.totalorder %s26, 0
      %p133 = por %p131, %p132
      %p134 = scmp.ne.s32.totalorder %s120, %s121
      %p135 = scmp.eq.s32.totalorder %s27, 1
      %p136 = por %p134, %p135
      %p138 = scmp.ne.s32.totalorder %s121, %s137
      %p139 = scmp.eq.s32.totalorder %s27, 0
      %p140 = por %p138, %p139
      %s142 = sadd.s32 %s141, 1
      %p145 = scmp.eq.s32.totalorder %s21, 1
      %p146 = scmp.ne.s32.totalorder %s141, %s143
      %p147 = scmp.eq.s32.totalorder %s21, 0
      %p148 = por %p146, %p147
      %p149 = scmp.ne.s32.totalorder %s141, %s143
      %p150 = scmp.eq.s32.totalorder %s26, 1
      %p151 = por %p149, %p150
      %p152 = scmp.ne.s32.totalorder %s143, %s144
      %p153 = scmp.eq.s32.totalorder %s26, 0
      %p154 = por %p152, %p153
      %p155 = scmp.ne.s32.totalorder %s143, %s144
      %p156 = scmp.eq.s32.totalorder %s27, 1
      %p157 = por %p155, %p156
      %p159 = scmp.ne.s32.totalorder %s144, %s158
      %p160 = scmp.eq.s32.totalorder %s27, 0
      %p161 = por %p159, %p160
      %s163 = sadd.s32 %s162, 1
      %p166 = scmp.eq.s32.totalorder %s21, 1
      %p167 = scmp.ne.s32.totalorder %s162, %s164
      %p168 = scmp.eq.s32.totalorder %s21, 0
      %p169 = por %p167, %p168
      %p170 = scmp.ne.s32.totalorder %s162, %s164
      %p171 = scmp.eq.s32.totalorder %s26, 1
      %p172 = por %p170, %p171
      %p173 = scmp.ne.s32.totalorder %s164, %s165
      %p174 = scmp.eq.s32.totalorder %s26, 0
      %p175 = por %p173, %p174
      %p176 = scmp.ne.s32.totalorder %s164, %s165
      %p177 = scmp.eq.s32.totalorder %s27, 1
      %p178 = por %p176, %p177
      %p180 = scmp.ne.s32.totalorder %s165, %s179
      %p181 = scmp.eq.s32.totalorder %s27, 0
      %p182 = por %p180, %p181
      %s183 = ssub.s32 %s28, %s40
      %s184 = ssub.s32 %s29, %s36
      %s185 = sor.u32 %s183, %s184
      %p186 = scmp.eq.s32.totalorder %s185, 0
      %s188 = sadd.s32 %s187, 1
      %s189 = scalar_select %p186, %s187, %s188
      %p192 = pneg %p186
      %p193 = scmp.eq.s32.totalorder %s21, 1
      %p194 = por %p192, %p193
      %p195 = scmp.ne.s32.totalorder %s187, %s190
      %p196 = scmp.eq.s32.totalorder %s21, 0
      %p197 = por %p195, %p196
      %p198 = scmp.ne.s32.totalorder %s187, %s190
      %p199 = scmp.eq.s32.totalorder %s26, 1
      %p200 = por %p198, %p199
      %p201 = scmp.ne.s32.totalorder %s190, %s191
      %p202 = scmp.eq.s32.totalorder %s26, 0
      %p203 = por %p201, %p202
      %p204 = scmp.ne.s32.totalorder %s190, %s191
      %p205 = scmp.eq.s32.totalorder %s27, 1
      %p206 = por %p204, %p205
      %p208 = scmp.ne.s32.totalorder %s191, %s207
      %p209 = scmp.eq.s32.totalorder %s27, 0
      %p210 = por %p208, %p209
      %p211 = scmp.le.s32.totalorder 1, %s21
      %p212 = scmp.lt.s32.totalorder %s21, 3
      %p213 = pnand %p211, %p212
      %p214 = pneg %p213
      // Predicated region
      $region9: #{tpu_custom_call.1} parent=5 // pred_check
        _
      $region10: #{tpu_custom_call.1} parent=5 // pred_check_branch
        %216 = sbr.rel (%p213) target = $region12
      $region11: #{tpu_custom_call.1} parent=5 // pred_region
        %s217 = ssub.s32 %s21, 1
        // Predicated region
        $region13: #{tpu_custom_call.1} parent=11 // pred_check
          %p218 = pneg %p154
        $region14: #{tpu_custom_call.1} parent=11 // pred_check_branch
          %220 = sbr.rel (%p218) target = $region16
        $region15: #{tpu_custom_call.1} parent=11 // pred_region
          %s222 = ssub.s32 12800, 12800
          %223 = vsyncadd [#allocation9], %s222
          %s224 = sshll.u32 [#allocation8], 4
          %s225 = int_to_ptr.vmem [resolvable:$true] %s224
          %230 = dma.hbm_to_vmem [thread:$0]  %s3, 12800, %s225, [#allocation9], 512, 512, 32
        $region16: #{tpu_custom_call.1} parent=11 // pred_fallthru
          _
        // Predicated region
        $region17: #{tpu_custom_call.1} parent=11 // pred_check
          %p231 = pneg %p175
        $region18: #{tpu_custom_call.1} parent=11 // pred_check_branch
          %233 = sbr.rel (%p231) target = $region20
        $region19: #{tpu_custom_call.1} parent=11 // pred_region
          %s235 = ssub.s32 512, 512
          %236 = vsyncadd [#allocation9], %s235
          %s238 = sshll.u32 [#allocation10], 4
          %s239 = int_to_ptr.vmem [resolvable:$true] %s238
          %241 = dma.hbm_to_vmem [thread:$0]  %s4, 512, %s239, [#allocation9]
        $region20: #{tpu_custom_call.1} parent=11 // pred_fallthru
          _
      $region12: #{tpu_custom_call.1} parent=5 // pred_fallthru
        _
      %p242 = scmp.lt.s32.totalorder %s21, 2
      // Predicated region
      $region21: #{tpu_custom_call.1} parent=5 // pred_check
        %p243 = pneg %p242
      $region22: #{tpu_custom_call.1} parent=5 // pred_check_branch
        %245 = sbr.rel (%p243) target = $region24
      $region23: #{tpu_custom_call.1} parent=5 // pred_region
        // Predicated region
        $region25: #{tpu_custom_call.1} parent=23 // pred_check
          %p246 = pneg %p55
        $region26: #{tpu_custom_call.1} parent=23 // pred_check_branch
          %248 = sbr.rel (%p246) target = $region28
        $region27: #{tpu_custom_call.1} parent=23 // pred_region
          %s249 = sand.u32 %s45, 1
          %s250 = scalar_lea.sflag [#allocation3], %s249
          %s251 = sand.u32 %s45, 1
          %s252 = smul.addr %s251, 64
          %s253 = scalar_lea.vmem [#allocation2], %s252
          %s254 = smul.u32 2, %s29
          %s256 = ssub.s32 1024, 1024
          %257 = vsyncadd %s250, %s256
          %s258 = smul.addr %s254, 4
          %s259 = smul.addr %s28, 8
          %s260 = sadd.s32 %s258, %s259
          %s261 = smul.addr %s260, 128
          %s262 = scalar_lea.hbm %s0, %s261
          %s263 = sshll.u32 %s253, 4
          %s264 = int_to_ptr.vmem [resolvable:$true] %s263
          %269 = dma.hbm_to_vmem [thread:$0]  %s262, 1024, %s264, %s250, 512, 512, 32
        $region28: #{tpu_custom_call.1} parent=23 // pred_fallthru
          _
        // Predicated region
        $region29: #{tpu_custom_call.1} parent=23 // pred_check
          %p270 = pneg %p91
        $region30: #{tpu_custom_call.1} parent=23 // pred_check_branch
          %272 = sbr.rel (%p270) target = $region32
        $region31: #{tpu_custom_call.1} parent=23 // pred_region
          %s273 = sand.u32 %s21, 1
          %s274 = scalar_lea.sflag [#allocation6], %s273
          %s275 = sand.u32 %s81, 1
          %s276 = smul.addr %s275, 32
          %s277 = scalar_lea.vmem [#allocation5], %s276
          %s278 = smul.u32 %s29, 2
          %s279 = ssub.s32 %s278, 1
          %p280 = scmp.gt.s32.totalorder %s279, 0
          %s281 = scalar_select %p280, %s279, 0
          %s283 = ssub.s32 512, 512
          %284 = vsyncadd %s274, %s283
          %s285 = smul.addr %s281, 4
          %s286 = smul.addr %s28, 8
          %s287 = sadd.s32 %s285, %s286
          %s288 = smul.addr %s287, 128
          %s289 = scalar_lea.hbm %s1, %s288
          %s291 = sshll.u32 %s277, 4
          %s292 = int_to_ptr.vmem [resolvable:$true] %s291
          %294 = dma.hbm_to_vmem [thread:$0]  %s289, 512, %s292, %s274
        $region32: #{tpu_custom_call.1} parent=23 // pred_fallthru
          _
        // Predicated region
        $region33: #{tpu_custom_call.1} parent=23 // pred_check
          %p295 = pneg %p127
        $region34: #{tpu_custom_call.1} parent=23 // pred_check_branch
          %297 = sbr.rel (%p295) target = $region36
        $region35: #{tpu_custom_call.1} parent=23 // pred_region
          %s298 = sand.u32 %s21, 1
          %s299 = scalar_lea.sflag [#allocation6], %s298
          %s300 = sand.u32 %s117, 1
          %s301 = smul.addr %s300, 32
          %s302 = scalar_lea.vmem [#allocation7], %s301
          %s303 = sadd.s32 %s29, 1
          %s304 = smul.u32 %s303, 2
          %p305 = scmp.lt.s32.totalorder %s304, 1
          %s306 = scalar_select %p305, %s304, 1
          %s308 = ssub.s32 512, 512
          %309 = vsyncadd %s299, %s308
          %s310 = smul.addr %s306, 4
          %s311 = smul.addr %s28, 8
          %s312 = sadd.s32 %s310, %s311
          %s313 = smul.addr %s312, 128
          %s314 = scalar_lea.hbm %s2, %s313
          %s316 = sshll.u32 %s302, 4
          %s317 = int_to_ptr.vmem [resolvable:$true] %s316
          %319 = dma.hbm_to_vmem [thread:$0]  %s314, 512, %s317, %s299
        $region36: #{tpu_custom_call.1} parent=23 // pred_fallthru
          _
      $region24: #{tpu_custom_call.1} parent=5 // pred_fallthru
        _
      %p320 = scmp.le.s32.totalorder 1, %s21
      %p321 = scmp.lt.s32.totalorder %s21, 3
      %p322 = pnand %p320, %p321
      %p323 = pneg %p322
      // Predicated region
      $region37: #{tpu_custom_call.1} parent=5 // pred_check
        _
      $region38: #{tpu_custom_call.1} parent=5 // pred_check_branch
        %325 = sbr.rel (%p322) target = $region40
      $region39: #{tpu_custom_call.1} parent=5 // pred_region
        %s326 = ssub.s32 %s21, 1
        %s327 = sand.u32 %s48, 1
        %s328 = scalar_lea.sflag [#allocation3], %s327
        %s329 = sand.u32 %s48, 1
        %s330 = smul.addr %s329, 64
        %s331 = scalar_lea.vmem [#allocation2], %s330
        // Predicated region
        $region41: #{tpu_custom_call.1} parent=39 // pred_check
          %p332 = pneg %p61
        $region42: #{tpu_custom_call.1} parent=39 // pred_check_branch
          %334 = sbr.rel (%p332) target = $region44
        $region43: #{tpu_custom_call.1} parent=39 // pred_region
          %335 = dma.done %s328, 1024
        $region44: #{tpu_custom_call.1} parent=39 // pred_fallthru
          _
        %s336 = sand.u32 %s26, 1
        %s337 = scalar_lea.sflag [#allocation6], %s336
        %s338 = sand.u32 %s84, 1
        %s339 = smul.addr %s338, 32
        %s340 = scalar_lea.vmem [#allocation5], %s339
        // Predicated region
        $region45: #{tpu_custom_call.1} parent=39 // pred_check
          %p341 = pneg %p97
        $region46: #{tpu_custom_call.1} parent=39 // pred_check_branch
          %343 = sbr.rel (%p341) target = $region48
        $region47: #{tpu_custom_call.1} parent=39 // pred_region
          %344 = dma.done %s337, 512
        $region48: #{tpu_custom_call.1} parent=39 // pred_fallthru
          _
        %s345 = sand.u32 %s26, 1
        %s346 = scalar_lea.sflag [#allocation6], %s345
        %s347 = sand.u32 %s120, 1
        %s348 = smul.addr %s347, 32
        %s349 = scalar_lea.vmem [#allocation7], %s348
        // Predicated region
        $region49: #{tpu_custom_call.1} parent=39 // pred_check
          %p350 = pneg %p133
        $region50: #{tpu_custom_call.1} parent=39 // pred_check_branch
          %352 = sbr.rel (%p350) target = $region52
        $region51: #{tpu_custom_call.1} parent=39 // pred_region
          %353 = dma.done %s346, 512
        $region52: #{tpu_custom_call.1} parent=39 // pred_fallthru
          _
        // Predicated region
        $region53: #{tpu_custom_call.1} parent=39 // pred_check
          %p354 = pneg %p154
        $region54: #{tpu_custom_call.1} parent=39 // pred_check_branch
          %356 = sbr.rel (%p354) target = $region56
        $region55: #{tpu_custom_call.1} parent=39 // pred_region
          %357 = dma.done [#allocation9], 12800
        $region56: #{tpu_custom_call.1} parent=39 // pred_fallthru
          _
        // Predicated region
        $region57: #{tpu_custom_call.1} parent=39 // pred_check
          %p358 = pneg %p175
        $region58: #{tpu_custom_call.1} parent=39 // pred_check_branch
          %360 = sbr.rel (%p358) target = $region60
        $region59: #{tpu_custom_call.1} parent=39 // pred_region
          %361 = dma.done [#allocation9], 512
        $region60: #{tpu_custom_call.1} parent=39 // pred_fallthru
          _
        %s362 = sand.u32 %s48, 1
        %s363 = scalar_lea.sflag [#allocation3], %s362
        %s364 = sand.u32 %s48, 1
        %s365 = smul.addr %s364, 64
        %s366 = scalar_lea.vmem [#allocation2], %s365
        %p367 = pneg %p61
        %p368 = pneg %p58
        %s369 = sand.u32 %s26, 1
        %s370 = scalar_lea.sflag [#allocation6], %s369
        %s371 = sand.u32 %s84, 1
        %s372 = smul.addr %s371, 32
        %s373 = scalar_lea.vmem [#allocation5], %s372
        %p374 = pneg %p97
        %p375 = pneg %p94
        %s376 = sand.u32 %s26, 1
        %s377 = scalar_lea.sflag [#allocation6], %s376
        %s378 = sand.u32 %s120, 1
        %s379 = smul.addr %s378, 32
        %s380 = scalar_lea.vmem [#allocation7], %s379
        %p381 = pneg %p133
        %p382 = pneg %p130
        %p383 = pneg %p154
        %p384 = pneg %p151
        %p385 = pneg %p175
        %p386 = pneg %p172
        %p387 = pneg %p203
        %p388 = pneg %p200
        %s389 = sand.u32 %s190, 1
        %s390 = scalar_lea.sflag [#allocation4], %s389
        %s391 = sand.u32 %s190, 1
        %s392 = smul.addr %s391, 64
        %s393 = scalar_lea.vmem [#allocation11], %s392
        %s394 = smul.u32 2, %s31
        %s395 = smul.u32 %s31, 2
        %s396 = ssub.s32 %s395, 1
        %p397 = scmp.gt.s32.totalorder %s396, 0
        %s398 = scalar_select %p397, %s396, 0
        %s399 = sadd.s32 %s31, 1
        %s400 = smul.u32 %s399, 2
        %p401 = scmp.lt.s32.totalorder %s400, 1
        %s402 = scalar_select %p401, %s400, 1
        %s403 = smul.u32 2, %s31
        %v404 = vld [vmem:[#allocation10] sm:$0xff]
        %v405 = vld [vmem:[#allocation10 + $0x8] sm:$0xff]
        %v406 = vld [vmem:[#allocation10 + $0x10] sm:$0xff]
        %v407 = vld [vmem:[#allocation10 + $0x18] sm:$0xff]
        %v408 = vlaneseq
        %v409 = vshrl.u32 %v408, 7
        %v410 = vld [vmem:[%s340] sm:$0xff]
        %v411 = vld [vmem:[%s340 + $0x8] sm:$0xff]
        %v412 = vld [vmem:[%s340 + $0x10] sm:$0xff]
        %v413 = vld [vmem:[%s340 + $0x18] sm:$0xff]
        %p414 = scmp.gt.s32.totalorder %s31, 0
        %s415 = scalar_select %p414, 1, 0
        %s416 = scvt.s32.f32 %s415
        %v417 = vstv %s416
        %v418 = vmul.f32 %v410, %v417
        %v419 = vmul.f32 %v411, %v417
        %v420 = vmul.f32 %v412, %v417
        %v421 = vmul.f32 %v413, %v417
        %v422 = vld [vmem:[%s349] sm:$0xff]
        %v423 = vld [vmem:[%s349 + $0x8] sm:$0xff]
        %v424 = vld [vmem:[%s349 + $0x10] sm:$0xff]
        %v425 = vld [vmem:[%s349 + $0x18] sm:$0xff]
        %p426 = scmp.lt.s32.totalorder %s31, 0
        %s427 = scalar_select %p426, 1, 0
        %s428 = scvt.s32.f32 %s427
        %v429 = vstv %s428
        %v430 = vmul.f32 %v422, %v429
        %v431 = vmul.f32 %v423, %v429
        %v432 = vmul.f32 %v424, %v429
        %v433 = vmul.f32 %v425, %v429
        %v434 = vld [vmem:[%s331] sm:$0xff]
        %v435 = vld [vmem:[%s331 + $0x8] sm:$0xff]
        %v436 = vld [vmem:[%s331 + $0x10] sm:$0xff]
        %v437 = vld [vmem:[%s331 + $0x18] sm:$0xff]
        %v438 = vld [vmem:[%s331 + $0x20] sm:$0xff]
        %v439 = vld [vmem:[%s331 + $0x28] sm:$0xff]
        %v440 = vld [vmem:[%s331 + $0x30] sm:$0xff]
        %v441 = vld [vmem:[%s331 + $0x38] sm:$0xff]
        %vm442 = vcmp.ge.s32.totalorder %v409, 6
        %v443 = vsel %vm442, %v418, %v434
        %v444 = vsel %vm442, %v419, %v435
        %v445 = vsel %vm442, %v420, %v436
        %v446 = vsel %vm442, %v421, %v437
        %v447 = vrot.slane %v443, 6
        %v448 = vrot.slane %v444, 6
        %v449 = vrot.slane %v445, 6
        %v450 = vrot.slane %v446, 6
        %451 = vrot.lane.b32.xlu0 %v447, 64
        %v452 = vpop.permute.xlu0 %451
        %453 = vrot.lane.b32.xlu0 %v448, 64
        %v454 = vpop.permute.xlu0 %453
        %455 = vrot.lane.b32.xlu0 %v449, 64
        %v456 = vpop.permute.xlu0 %455
        %457 = vrot.lane.b32.xlu0 %v450, 64
        %v458 = vpop.permute.xlu0 %457
        %v459 = vlaneseq
        %v460 = vand.u32 %v459, 127
        %vm461 = vcmp.lt.s32.totalorder %v460, 64
        %v462 = vsel %vm461, %v456, %v458
        %v463 = vsel %vm461, %v454, %v456
        %v464 = vsel %vm461, %v452, %v454
        %v465 = vsel %vm461, %v458, %v452
        %v466 = vld [vmem:[#allocation8] sm:$0xff]
        %v467 = vld [vmem:[#allocation8 + $0x8] sm:$0xff]
        %v468 = vld [vmem:[#allocation8 + $0x10] sm:$0xff]
        %v469 = vld [vmem:[#allocation8 + $0x18] sm:$0xff]
        %v470 = vmul.f32 %v465, %v466
        %v471 = vmul.f32 %v464, %v467
        %v472 = vmul.f32 %v463, %v468
        %v473 = vmul.f32 %v462, %v469
        %v474 = vadd.f32 %v404, %v470
        %v475 = vadd.f32 %v405, %v471
        %v476 = vadd.f32 %v406, %v472
        %v477 = vadd.f32 %v407, %v473
        %478 = vrot.lane.b32.xlu0 %v447, 32
        %v479 = vpop.permute.xlu0 %478
        %480 = vrot.lane.b32.xlu0 %v448, 32
        %v481 = vpop.permute.xlu0 %480
        %482 = vrot.lane.b32.xlu0 %v449, 32
        %v483 = vpop.permute.xlu0 %482
        %484 = vrot.lane.b32.xlu0 %v450, 32
        %v485 = vpop.permute.xlu0 %484
        %vm486 = vcmp.lt.s32.totalorder %v460, 32
        %v487 = vsel %vm486, %v483, %v485
        %v488 = vsel %vm486, %v481, %v483
        %v489 = vsel %vm486, %v479, %v481
        %v490 = vsel %vm486, %v485, %v479
        %s491 = scalar_lea.vmem [#allocation8], 32
        %v492 = vld [vmem:[%s491] sm:$0xff]
        %v493 = vld [vmem:[%s491 + $0x8] sm:$0xff]
        %v494 = vld [vmem:[%s491 + $0x10] sm:$0xff]
        %v495 = vld [vmem:[%s491 + $0x18] sm:$0xff]
        %v496 = vmul.f32 %v490, %v492
        %v497 = vmul.f32 %v489, %v493
        %v498 = vmul.f32 %v488, %v494
        %v499 = vmul.f32 %v487, %v495
        %v500 = vadd.f32 %v474, %v496
        %v501 = vadd.f32 %v475, %v497
        %v502 = vadd.f32 %v476, %v498
        %v503 = vadd.f32 %v477, %v499
        %s504 = scalar_lea.vmem [#allocation8], 64
        %v505 = vld [vmem:[%s504] sm:$0xff]
        %v506 = vld [vmem:[%s504 + $0x8] sm:$0xff]
        %v507 = vld [vmem:[%s504 + $0x10] sm:$0xff]
        %v508 = vld [vmem:[%s504 + $0x18] sm:$0xff]
        %v509 = vmul.f32 %v447, %v505
        %v510 = vmul.f32 %v448, %v506
        %v511 = vmul.f32 %v449, %v507
        %v512 = vmul.f32 %v450, %v508
        %v513 = vadd.f32 %v500, %v509
        %v514 = vadd.f32 %v501, %v510
        %v515 = vadd.f32 %v502, %v511
        %v516 = vadd.f32 %v503, %v512
        %517 = vrot.lane.b32.xlu0 %v447, 96
        %v518 = vpop.permute.xlu0 %517
        %519 = vrot.lane.b32.xlu0 %v448, 96
        %v520 = vpop.permute.xlu0 %519
        %521 = vrot.lane.b32.xlu0 %v449, 96
        %v522 = vpop.permute.xlu0 %521
        %523 = vrot.lane.b32.xlu0 %v450, 96
        %v524 = vpop.permute.xlu0 %523
        %vm525 = vcmp.lt.s32.totalorder %v460, 96
        %v526 = vsel %vm525, %v522, %v524
        %v527 = vsel %vm525, %v520, %v522
        %v528 = vsel %vm525, %v518, %v520
        %v529 = vsel %vm525, %v524, %v518
        %s530 = scalar_lea.vmem [#allocation8], 96
        %v531 = vld [vmem:[%s530] sm:$0xff]
        %v532 = vld [vmem:[%s530 + $0x8] sm:$0xff]
        %v533 = vld [vmem:[%s530 + $0x10] sm:$0xff]
        %v534 = vld [vmem:[%s530 + $0x18] sm:$0xff]
        %v535 = vmul.f32 %v528, %v531
        %v536 = vmul.f32 %v527, %v532
        %v537 = vmul.f32 %v526, %v533
        %v538 = vmul.f32 %v529, %v534
        %v539 = vadd.f32 %v513, %v535
        %v540 = vadd.f32 %v514, %v536
        %v541 = vadd.f32 %v515, %v537
        %v542 = vadd.f32 %v516, %v538
        %s543 = scalar_lea.vmem [#allocation8], 128
        %v544 = vld [vmem:[%s543] sm:$0xff]
        %v545 = vld [vmem:[%s543 + $0x8] sm:$0xff]
        %v546 = vld [vmem:[%s543 + $0x10] sm:$0xff]
        %v547 = vld [vmem:[%s543 + $0x18] sm:$0xff]
        %v548 = vmul.f32 %v464, %v544
        %v549 = vmul.f32 %v463, %v545
        %v550 = vmul.f32 %v462, %v546
        %v551 = vmul.f32 %v465, %v547
        %v552 = vadd.f32 %v539, %v548
        %v553 = vadd.f32 %v540, %v549
        %v554 = vadd.f32 %v541, %v550
        %v555 = vadd.f32 %v542, %v551
        %vm556 = vcmp.ge.s32.totalorder %v409, 7
        %v557 = vsel %vm556, %v418, %v434
        %v558 = vsel %vm556, %v419, %v435
        %v559 = vsel %vm556, %v420, %v436
        %v560 = vsel %vm556, %v421, %v437
        %v561 = vrot.slane %v557, 7
        %v562 = vrot.slane %v558, 7
        %v563 = vrot.slane %v559, 7
        %v564 = vrot.slane %v560, 7
        %565 = vrot.lane.b32.xlu0 %v561, 64
        %v566 = vpop.permute.xlu0 %565
        %567 = vrot.lane.b32.xlu0 %v562, 64
        %v568 = vpop.permute.xlu0 %567
        %569 = vrot.lane.b32.xlu0 %v563, 64
        %v570 = vpop.permute.xlu0 %569
        %571 = vrot.lane.b32.xlu0 %v564, 64
        %v572 = vpop.permute.xlu0 %571
        %v573 = vsel %vm461, %v570, %v572
        %v574 = vsel %vm461, %v568, %v570
        %v575 = vsel %vm461, %v566, %v568
        %v576 = vsel %vm461, %v572, %v566
        %s577 = scalar_lea.vmem [#allocation8], 160
        %v578 = vld [vmem:[%s577] sm:$0xff]
        %v579 = vld [vmem:[%s577 + $0x8] sm:$0xff]
        %v580 = vld [vmem:[%s577 + $0x10] sm:$0xff]
        %v581 = vld [vmem:[%s577 + $0x18] sm:$0xff]
        %v582 = vmul.f32 %v576, %v578
        %v583 = vmul.f32 %v575, %v579
        %v584 = vmul.f32 %v574, %v580
        %v585 = vmul.f32 %v573, %v581
        %v586 = vadd.f32 %v552, %v582
        %v587 = vadd.f32 %v553, %v583
        %v588 = vadd.f32 %v554, %v584
        %v589 = vadd.f32 %v555, %v585
        %590 = vrot.lane.b32.xlu0 %v561, 32
        %v591 = vpop.permute.xlu0 %590
        %592 = vrot.lane.b32.xlu0 %v562, 32
        %v593 = vpop.permute.xlu0 %592
        %594 = vrot.lane.b32.xlu0 %v563, 32
        %v595 = vpop.permute.xlu0 %594
        %596 = vrot.lane.b32.xlu0 %v564, 32
        %v597 = vpop.permute.xlu0 %596
        %v598 = vsel %vm486, %v595, %v597
        %v599 = vsel %vm486, %v593, %v595
        %v600 = vsel %vm486, %v591, %v593
        %v601 = vsel %vm486, %v597, %v591
        %s602 = scalar_lea.vmem [#allocation8], 192
        %v603 = vld [vmem:[%s602] sm:$0xff]
        %v604 = vld [vmem:[%s602 + $0x8] sm:$0xff]
        %v605 = vld [vmem:[%s602 + $0x10] sm:$0xff]
        %v606 = vld [vmem:[%s602 + $0x18] sm:$0xff]
        %v607 = vmul.f32 %v601, %v603
        %v608 = vmul.f32 %v600, %v604
        %v609 = vmul.f32 %v599, %v605
        %v610 = vmul.f32 %v598, %v606
        %v611 = vadd.f32 %v586, %v607
        %v612 = vadd.f32 %v587, %v608
        %v613 = vadd.f32 %v588, %v609
        %v614 = vadd.f32 %v589, %v610
        %s615 = scalar_lea.vmem [#allocation8], 224
        %v616 = vld [vmem:[%s615] sm:$0xff]
        %v617 = vld [vmem:[%s615 + $0x8] sm:$0xff]
        %v618 = vld [vmem:[%s615 + $0x10] sm:$0xff]
        %v619 = vld [vmem:[%s615 + $0x18] sm:$0xff]
        %v620 = vmul.f32 %v561, %v616
        %v621 = vmul.f32 %v562, %v617
        %v622 = vmul.f32 %v563, %v618
        %v623 = vmul.f32 %v564, %v619
        %v624 = vadd.f32 %v611, %v620
        %v625 = vadd.f32 %v612, %v621
        %v626 = vadd.f32 %v613, %v622
        %v627 = vadd.f32 %v614, %v623
        %628 = vrot.lane.b32.xlu0 %v561, 96
        %v629 = vpop.permute.xlu0 %628
        %630 = vrot.lane.b32.xlu0 %v562, 96
        %v631 = vpop.permute.xlu0 %630
        %632 = vrot.lane.b32.xlu0 %v563, 96
        %v633 = vpop.permute.xlu0 %632
        %634 = vrot.lane.b32.xlu0 %v564, 96
        %v635 = vpop.permute.xlu0 %634
        %v636 = vsel %vm525, %v633, %v635
        %v637 = vsel %vm525, %v631, %v633
        %v638 = vsel %vm525, %v629, %v631
        %v639 = vsel %vm525, %v635, %v629
        %s640 = scalar_lea.vmem [#allocation8], 256
        %v641 = vld [vmem:[%s640] sm:$0xff]
        %v642 = vld [vmem:[%s640 + $0x8] sm:$0xff]
        %v643 = vld [vmem:[%s640 + $0x10] sm:$0xff]
        %v644 = vld [vmem:[%s640 + $0x18] sm:$0xff]
        %v645 = vmul.f32 %v638, %v641
        %v646 = vmul.f32 %v637, %v642
        %v647 = vmul.f32 %v636, %v643
        %v648 = vmul.f32 %v639, %v644
        %v649 = vadd.f32 %v624, %v645
        %v650 = vadd.f32 %v625, %v646
        %v651 = vadd.f32 %v626, %v647
        %v652 = vadd.f32 %v627, %v648
        %s653 = scalar_lea.vmem [#allocation8], 288
        %v654 = vld [vmem:[%s653] sm:$0xff]
        %v655 = vld [vmem:[%s653 + $0x8] sm:$0xff]
        %v656 = vld [vmem:[%s653 + $0x10] sm:$0xff]
        %v657 = vld [vmem:[%s653 + $0x18] sm:$0xff]
        %v658 = vmul.f32 %v575, %v654
        %v659 = vmul.f32 %v574, %v655
        %v660 = vmul.f32 %v573, %v656
        %v661 = vmul.f32 %v576, %v657
        %v662 = vadd.f32 %v649, %v658
        %v663 = vadd.f32 %v650, %v659
        %v664 = vadd.f32 %v651, %v660
        %v665 = vadd.f32 %v652, %v661
        %666 = vrot.lane.b32.xlu0 %v434, 64
        %v667 = vpop.permute.xlu0 %666
        %668 = vrot.lane.b32.xlu0 %v435, 64
        %v669 = vpop.permute.xlu0 %668
        %670 = vrot.lane.b32.xlu0 %v436, 64
        %v671 = vpop.permute.xlu0 %670
        %672 = vrot.lane.b32.xlu0 %v437, 64
        %v673 = vpop.permute.xlu0 %672
        %v674 = vsel %vm461, %v671, %v673
        %v675 = vsel %vm461, %v669, %v671
        %v676 = vsel %vm461, %v667, %v669
        %v677 = vsel %vm461, %v673, %v667
        %s678 = scalar_lea.vmem [#allocation8], 320
        %v679 = vld [vmem:[%s678] sm:$0xff]
        %v680 = vld [vmem:[%s678 + $0x8] sm:$0xff]
        %v681 = vld [vmem:[%s678 + $0x10] sm:$0xff]
        %v682 = vld [vmem:[%s678 + $0x18] sm:$0xff]
        %v683 = vmul.f32 %v677, %v679
        %v684 = vmul.f32 %v676, %v680
        %v685 = vmul.f32 %v675, %v681
        %v686 = vmul.f32 %v674, %v682
        %v687 = vadd.f32 %v662, %v683
        %v688 = vadd.f32 %v663, %v684
        %v689 = vadd.f32 %v664, %v685
        %v690 = vadd.f32 %v665, %v686
        %691 = vrot.lane.b32.xlu0 %v434, 32
        %v692 = vpop.permute.xlu0 %691
        %693 = vrot.lane.b32.xlu0 %v435, 32
        %v694 = vpop.permute.xlu0 %693
        %695 = vrot.lane.b32.xlu0 %v436, 32
        %v696 = vpop.permute.xlu0 %695
        %697 = vrot.lane.b32.xlu0 %v437, 32
        %v698 = vpop.permute.xlu0 %697
        %v699 = vsel %vm486, %v696, %v698
        %v700 = vsel %vm486, %v694, %v696
        %v701 = vsel %vm486, %v692, %v694
        %v702 = vsel %vm486, %v698, %v692
        %s703 = scalar_lea.vmem [#allocation8], 352
        %v704 = vld [vmem:[%s703] sm:$0xff]
        %v705 = vld [vmem:[%s703 + $0x8] sm:$0xff]
        %v706 = vld [vmem:[%s703 + $0x10] sm:$0xff]
        %v707 = vld [vmem:[%s703 + $0x18] sm:$0xff]
        %v708 = vmul.f32 %v702, %v704
        %v709 = vmul.f32 %v701, %v705
        %v710 = vmul.f32 %v700, %v706
        %v711 = vmul.f32 %v699, %v707
        %v712 = vadd.f32 %v687, %v708
        %v713 = vadd.f32 %v688, %v709
        %v714 = vadd.f32 %v689, %v710
        %v715 = vadd.f32 %v690, %v711
        %s716 = scalar_lea.vmem [#allocation8], 384
        %v717 = vld [vmem:[%s716] sm:$0xff]
        %v718 = vld [vmem:[%s716 + $0x8] sm:$0xff]
        %v719 = vld [vmem:[%s716 + $0x10] sm:$0xff]
        %v720 = vld [vmem:[%s716 + $0x18] sm:$0xff]
        %v721 = vmul.f32 %v434, %v717
        %v722 = vmul.f32 %v435, %v718
        %v723 = vmul.f32 %v436, %v719
        %v724 = vmul.f32 %v437, %v720
        %v725 = vadd.f32 %v712, %v721
        %v726 = vadd.f32 %v713, %v722
        %v727 = vadd.f32 %v714, %v723
        %v728 = vadd.f32 %v715, %v724
        %729 = vrot.lane.b32.xlu0 %v434, 96
        %v730 = vpop.permute.xlu0 %729
        %731 = vrot.lane.b32.xlu0 %v435, 96
        %v732 = vpop.permute.xlu0 %731
        %733 = vrot.lane.b32.xlu0 %v436, 96
        %v734 = vpop.permute.xlu0 %733
        %735 = vrot.lane.b32.xlu0 %v437, 96
        %v736 = vpop.permute.xlu0 %735
        %v737 = vsel %vm525, %v734, %v736
        %v738 = vsel %vm525, %v732, %v734
        %v739 = vsel %vm525, %v730, %v732
        %v740 = vsel %vm525, %v736, %v730
        %s741 = scalar_lea.vmem [#allocation8], 416
        %v742 = vld [vmem:[%s741] sm:$0xff]
        %v743 = vld [vmem:[%s741 + $0x8] sm:$0xff]
        %v744 = vld [vmem:[%s741 + $0x10] sm:$0xff]
        %v745 = vld [vmem:[%s741 + $0x18] sm:$0xff]
        %v746 = vmul.f32 %v739, %v742
        %v747 = vmul.f32 %v738, %v743
        %v748 = vmul.f32 %v737, %v744
        %v749 = vmul.f32 %v740, %v745
        %v750 = vadd.f32 %v725, %v746
        %v751 = vadd.f32 %v726, %v747
        %v752 = vadd.f32 %v727, %v748
        %v753 = vadd.f32 %v728, %v749
        %s754 = scalar_lea.vmem [#allocation8], 448
        %v755 = vld [vmem:[%s754] sm:$0xff]
        %v756 = vld [vmem:[%s754 + $0x8] sm:$0xff]
        %v757 = vld [vmem:[%s754 + $0x10] sm:$0xff]
        %v758 = vld [vmem:[%s754 + $0x18] sm:$0xff]
        %v759 = vmul.f32 %v676, %v755
        %v760 = vmul.f32 %v675, %v756
        %v761 = vmul.f32 %v674, %v757
        %v762 = vmul.f32 %v677, %v758
        %v763 = vadd.f32 %v750, %v759
        %v764 = vadd.f32 %v751, %v760
        %v765 = vadd.f32 %v752, %v761
        %v766 = vadd.f32 %v753, %v762
        %vm767 = vcmp.lt.s32.totalorder %v409, 1
        %v768 = vsel %vm767, %v438, %v434
        %v769 = vsel %vm767, %v439, %v435
        %v770 = vsel %vm767, %v440, %v436
        %v771 = vsel %vm767, %v441, %v437
        %v772 = vrot.slane %v768, 1
        %v773 = vrot.slane %v769, 1
        %v774 = vrot.slane %v770, 1
        %v775 = vrot.slane %v771, 1
        %776 = vrot.lane.b32.xlu0 %v772, 64
        %v777 = vpop.permute.xlu0 %776
        %778 = vrot.lane.b32.xlu0 %v773, 64
        %v779 = vpop.permute.xlu0 %778
        %780 = vrot.lane.b32.xlu0 %v774, 64
        %v781 = vpop.permute.xlu0 %780
        %782 = vrot.lane.b32.xlu0 %v775, 64
        %v783 = vpop.permute.xlu0 %782
        %v784 = vsel %vm461, %v781, %v783
        %v785 = vsel %vm461, %v779, %v781
        %v786 = vsel %vm461, %v777, %v779
        %v787 = vsel %vm461, %v783, %v777
        %s788 = scalar_lea.vmem [#allocation8], 480
        %v789 = vld [vmem:[%s788] sm:$0xff]
        %v790 = vld [vmem:[%s788 + $0x8] sm:$0xff]
        %v791 = vld [vmem:[%s788 + $0x10] sm:$0xff]
        %v792 = vld [vmem:[%s788 + $0x18] sm:$0xff]
        %v793 = vmul.f32 %v787, %v789
        %v794 = vmul.f32 %v786, %v790
        %v795 = vmul.f32 %v785, %v791
        %v796 = vmul.f32 %v784, %v792
        %v797 = vadd.f32 %v763, %v793
        %v798 = vadd.f32 %v764, %v794
        %v799 = vadd.f32 %v765, %v795
        %v800 = vadd.f32 %v766, %v796
        %801 = vrot.lane.b32.xlu0 %v772, 32
        %v802 = vpop.permute.xlu0 %801
        %803 = vrot.lane.b32.xlu0 %v773, 32
        %v804 = vpop.permute.xlu0 %803
        %805 = vrot.lane.b32.xlu0 %v774, 32
        %v806 = vpop.permute.xlu0 %805
        %807 = vrot.lane.b32.xlu0 %v775, 32
        %v808 = vpop.permute.xlu0 %807
        %v809 = vsel %vm486, %v806, %v808
        %v810 = vsel %vm486, %v804, %v806
        %v811 = vsel %vm486, %v802, %v804
        %v812 = vsel %vm486, %v808, %v802
        %s813 = scalar_lea.vmem [#allocation8], 512
        %v814 = vld [vmem:[%s813] sm:$0xff]
        %v815 = vld [vmem:[%s813 + $0x8] sm:$0xff]
        %v816 = vld [vmem:[%s813 + $0x10] sm:$0xff]
        %v817 = vld [vmem:[%s813 + $0x18] sm:$0xff]
        %v818 = vmul.f32 %v812, %v814
        %v819 = vmul.f32 %v811, %v815
        %v820 = vmul.f32 %v810, %v816
        %v821 = vmul.f32 %v809, %v817
        %v822 = vadd.f32 %v797, %v818
        %v823 = vadd.f32 %v798, %v819
        %v824 = vadd.f32 %v799, %v820
        %v825 = vadd.f32 %v800, %v821
        %s826 = scalar_lea.vmem [#allocation8], 544
        %v827 = vld [vmem:[%s826] sm:$0xff]
        %v828 = vld [vmem:[%s826 + $0x8] sm:$0xff]
        %v829 = vld [vmem:[%s826 + $0x10] sm:$0xff]
        %v830 = vld [vmem:[%s826 + $0x18] sm:$0xff]
        %v831 = vmul.f32 %v772, %v827
        %v832 = vmul.f32 %v773, %v828
        %v833 = vmul.f32 %v774, %v829
        %v834 = vmul.f32 %v775, %v830
        %v835 = vadd.f32 %v822, %v831
        %v836 = vadd.f32 %v823, %v832
        %v837 = vadd.f32 %v824, %v833
        %v838 = vadd.f32 %v825, %v834
        %839 = vrot.lane.b32.xlu0 %v772, 96
        %v840 = vpop.permute.xlu0 %839
        %841 = vrot.lane.b32.xlu0 %v773, 96
        %v842 = vpop.permute.xlu0 %841
        %843 = vrot.lane.b32.xlu0 %v774, 96
        %v844 = vpop.permute.xlu0 %843
        %845 = vrot.lane.b32.xlu0 %v775, 96
        %v846 = vpop.permute.xlu0 %845
        %v847 = vsel %vm525, %v844, %v846
        %v848 = vsel %vm525, %v842, %v844
        %v849 = vsel %vm525, %v840, %v842
        %v850 = vsel %vm525, %v846, %v840
        %s851 = scalar_lea.vmem [#allocation8], 576
        %v852 = vld [vmem:[%s851] sm:$0xff]
        %v853 = vld [vmem:[%s851 + $0x8] sm:$0xff]
        %v854 = vld [vmem:[%s851 + $0x10] sm:$0xff]
        %v855 = vld [vmem:[%s851 + $0x18] sm:$0xff]
        %v856 = vmul.f32 %v849, %v852
        %v857 = vmul.f32 %v848, %v853
        %v858 = vmul.f32 %v847, %v854
        %v859 = vmul.f32 %v850, %v855
        %v860 = vadd.f32 %v835, %v856
        %v861 = vadd.f32 %v836, %v857
        %v862 = vadd.f32 %v837, %v858
        %v863 = vadd.f32 %v838, %v859
        %s864 = scalar_lea.vmem [#allocation8], 608
        %v865 = vld [vmem:[%s864] sm:$0xff]
        %v866 = vld [vmem:[%s864 + $0x8] sm:$0xff]
        %v867 = vld [vmem:[%s864 + $0x10] sm:$0xff]
        %v868 = vld [vmem:[%s864 + $0x18] sm:$0xff]
        %v869 = vmul.f32 %v786, %v865
        %v870 = vmul.f32 %v785, %v866
        %v871 = vmul.f32 %v784, %v867
        %v872 = vmul.f32 %v787, %v868
        %v873 = vadd.f32 %v860, %v869
        %v874 = vadd.f32 %v861, %v870
        %v875 = vadd.f32 %v862, %v871
        %v876 = vadd.f32 %v863, %v872
        %vm877 = vcmp.lt.s32.totalorder %v409, 2
        %v878 = vsel %vm877, %v438, %v434
        %v879 = vsel %vm877, %v439, %v435
        %v880 = vsel %vm877, %v440, %v436
        %v881 = vsel %vm877, %v441, %v437
        %v882 = vrot.slane %v878, 2
        %v883 = vrot.slane %v879, 2
        %v884 = vrot.slane %v880, 2
        %v885 = vrot.slane %v881, 2
        %886 = vrot.lane.b32.xlu0 %v882, 64
        %v887 = vpop.permute.xlu0 %886
        %888 = vrot.lane.b32.xlu0 %v883, 64
        %v889 = vpop.permute.xlu0 %888
        %890 = vrot.lane.b32.xlu0 %v884, 64
        %v891 = vpop.permute.xlu0 %890
        %892 = vrot.lane.b32.xlu0 %v885, 64
        %v893 = vpop.permute.xlu0 %892
        %v894 = vsel %vm461, %v891, %v893
        %v895 = vsel %vm461, %v889, %v891
        %v896 = vsel %vm461, %v887, %v889
        %v897 = vsel %vm461, %v893, %v887
        %s898 = scalar_lea.vmem [#allocation8], 640
        %v899 = vld [vmem:[%s898] sm:$0xff]
        %v900 = vld [vmem:[%s898 + $0x8] sm:$0xff]
        %v901 = vld [vmem:[%s898 + $0x10] sm:$0xff]
        %v902 = vld [vmem:[%s898 + $0x18] sm:$0xff]
        %v903 = vmul.f32 %v897, %v899
        %v904 = vmul.f32 %v896, %v900
        %v905 = vmul.f32 %v895, %v901
        %v906 = vmul.f32 %v894, %v902
        %v907 = vadd.f32 %v873, %v903
        %v908 = vadd.f32 %v874, %v904
        %v909 = vadd.f32 %v875, %v905
        %v910 = vadd.f32 %v876, %v906
        %911 = vrot.lane.b32.xlu0 %v882, 32
        %v912 = vpop.permute.xlu0 %911
        %913 = vrot.lane.b32.xlu0 %v883, 32
        %v914 = vpop.permute.xlu0 %913
        %915 = vrot.lane.b32.xlu0 %v884, 32
        %v916 = vpop.permute.xlu0 %915
        %917 = vrot.lane.b32.xlu0 %v885, 32
        %v918 = vpop.permute.xlu0 %917
        %v919 = vsel %vm486, %v916, %v918
        %v920 = vsel %vm486, %v914, %v916
        %v921 = vsel %vm486, %v912, %v914
        %v922 = vsel %vm486, %v918, %v912
        %s923 = scalar_lea.vmem [#allocation8], 672
        %v924 = vld [vmem:[%s923] sm:$0xff]
        %v925 = vld [vmem:[%s923 + $0x8] sm:$0xff]
        %v926 = vld [vmem:[%s923 + $0x10] sm:$0xff]
        %v927 = vld [vmem:[%s923 + $0x18] sm:$0xff]
        %v928 = vmul.f32 %v922, %v924
        %v929 = vmul.f32 %v921, %v925
        %v930 = vmul.f32 %v920, %v926
        %v931 = vmul.f32 %v919, %v927
        %v932 = vadd.f32 %v907, %v928
        %v933 = vadd.f32 %v908, %v929
        %v934 = vadd.f32 %v909, %v930
        %v935 = vadd.f32 %v910, %v931
        %s936 = scalar_lea.vmem [#allocation8], 704
        %v937 = vld [vmem:[%s936] sm:$0xff]
        %v938 = vld [vmem:[%s936 + $0x8] sm:$0xff]
        %v939 = vld [vmem:[%s936 + $0x10] sm:$0xff]
        %v940 = vld [vmem:[%s936 + $0x18] sm:$0xff]
        %v941 = vmul.f32 %v882, %v937
        %v942 = vmul.f32 %v883, %v938
        %v943 = vmul.f32 %v884, %v939
        %v944 = vmul.f32 %v885, %v940
        %v945 = vadd.f32 %v932, %v941
        %v946 = vadd.f32 %v933, %v942
        %v947 = vadd.f32 %v934, %v943
        %v948 = vadd.f32 %v935, %v944
        %949 = vrot.lane.b32.xlu0 %v882, 96
        %v950 = vpop.permute.xlu0 %949
        %951 = vrot.lane.b32.xlu0 %v883, 96
        %v952 = vpop.permute.xlu0 %951
        %953 = vrot.lane.b32.xlu0 %v884, 96
        %v954 = vpop.permute.xlu0 %953
        %955 = vrot.lane.b32.xlu0 %v885, 96
        %v956 = vpop.permute.xlu0 %955
        %v957 = vsel %vm525, %v954, %v956
        %v958 = vsel %vm525, %v952, %v954
        %v959 = vsel %vm525, %v950, %v952
        %v960 = vsel %vm525, %v956, %v950
        %s961 = scalar_lea.vmem [#allocation8], 736
        %v962 = vld [vmem:[%s961] sm:$0xff]
        %v963 = vld [vmem:[%s961 + $0x8] sm:$0xff]
        %v964 = vld [vmem:[%s961 + $0x10] sm:$0xff]
        %v965 = vld [vmem:[%s961 + $0x18] sm:$0xff]
        %v966 = vmul.f32 %v959, %v962
        %v967 = vmul.f32 %v958, %v963
        %v968 = vmul.f32 %v957, %v964
        %v969 = vmul.f32 %v960, %v965
        %v970 = vadd.f32 %v945, %v966
        %v971 = vadd.f32 %v946, %v967
        %v972 = vadd.f32 %v947, %v968
        %v973 = vadd.f32 %v948, %v969
        %s974 = scalar_lea.vmem [#allocation8], 768
        %v975 = vld [vmem:[%s974] sm:$0xff]
        %v976 = vld [vmem:[%s974 + $0x8] sm:$0xff]
        %v977 = vld [vmem:[%s974 + $0x10] sm:$0xff]
        %v978 = vld [vmem:[%s974 + $0x18] sm:$0xff]
        %v979 = vmul.f32 %v896, %v975
        %v980 = vmul.f32 %v895, %v976
        %v981 = vmul.f32 %v894, %v977
        %v982 = vmul.f32 %v897, %v978
        %v983 = vadd.f32 %v970, %v979
        %v984 = vadd.f32 %v971, %v980
        %v985 = vadd.f32 %v972, %v981
        %v986 = vadd.f32 %v973, %v982
        %v987 = vmul.f32 %v983, 0.5
        %v988 = vmul.f32 %v984, 0.5
        %v989 = vmul.f32 %v985, 0.5
        %v990 = vmul.f32 %v986, 0.5
        %v991 = vmul.f32 %v983, 0.70710677
        %v992 = vmul.f32 %v984, 0.70710677
        %v993 = vmul.f32 %v985, 0.70710677
        %v994 = vmul.f32 %v986, 0.70710677
        %v995 = verf.f32.pop %v991
        %v996 = verf.f32.pop %v992
        %v997 = verf.f32.pop %v993
        %v998 = verf.f32.pop %v994
        %v999 = vadd.f32 %v995, 1.0
        %v1000 = vadd.f32 %v996, 1.0
        %v1001 = vadd.f32 %v997, 1.0
        %v1002 = vadd.f32 %v998, 1.0
        %v1003 = vmul.f32 %v987, %v999
        %v1004 = vmul.f32 %v988, %v1000
        %v1005 = vmul.f32 %v989, %v1001
        %v1006 = vmul.f32 %v990, %v1002
        %1007 = vst [vmem:[%s393] sm:$0xff] %v1003
        %1008 = vst [vmem:[%s393 + $0x8] sm:$0xff] %v1004
        %1009 = vst [vmem:[%s393 + $0x10] sm:$0xff] %v1005
        %1010 = vst [vmem:[%s393 + $0x18] sm:$0xff] %v1006
        %v1011 = vld [vmem:[%s331 + $0x20] sm:$0xff]
        %v1012 = vld [vmem:[%s331 + $0x28] sm:$0xff]
        %v1013 = vld [vmem:[%s331 + $0x30] sm:$0xff]
        %v1014 = vld [vmem:[%s331 + $0x38] sm:$0xff]
        %v1015 = vld [vmem:[%s331] sm:$0xff]
        %v1016 = vld [vmem:[%s331 + $0x8] sm:$0xff]
        %v1017 = vld [vmem:[%s331 + $0x10] sm:$0xff]
        %v1018 = vld [vmem:[%s331 + $0x18] sm:$0xff]
        %v1019 = vsel %vm442, %v1015, %v1011
        %v1020 = vsel %vm442, %v1016, %v1012
        %v1021 = vsel %vm442, %v1017, %v1013
        %v1022 = vsel %vm442, %v1018, %v1014
        %v1023 = vrot.slane %v1019, 6
        %v1024 = vrot.slane %v1020, 6
        %v1025 = vrot.slane %v1021, 6
        %v1026 = vrot.slane %v1022, 6
        %1027 = vrot.lane.b32.xlu0 %v1023, 64
        %v1028 = vpop.permute.xlu0 %1027
        %1029 = vrot.lane.b32.xlu0 %v1024, 64
        %v1030 = vpop.permute.xlu0 %1029
        %1031 = vrot.lane.b32.xlu0 %v1025, 64
        %v1032 = vpop.permute.xlu0 %1031
        %1033 = vrot.lane.b32.xlu0 %v1026, 64
        %v1034 = vpop.permute.xlu0 %1033
        %v1035 = vsel %vm461, %v1032, %v1034
        %v1036 = vsel %vm461, %v1030, %v1032
        %v1037 = vsel %vm461, %v1028, %v1030
        %v1038 = vsel %vm461, %v1034, %v1028
        %v1039 = vld [vmem:[#allocation8] sm:$0xff]
        %v1040 = vld [vmem:[#allocation8 + $0x8] sm:$0xff]
        %v1041 = vld [vmem:[#allocation8 + $0x10] sm:$0xff]
        %v1042 = vld [vmem:[#allocation8 + $0x18] sm:$0xff]
        %v1043 = vmul.f32 %v1038, %v1039
        %v1044 = vmul.f32 %v1037, %v1040
        %v1045 = vmul.f32 %v1036, %v1041
        %v1046 = vmul.f32 %v1035, %v1042
        %v1047 = vadd.f32 %v404, %v1043
        %v1048 = vadd.f32 %v405, %v1044
        %v1049 = vadd.f32 %v406, %v1045
        %v1050 = vadd.f32 %v407, %v1046
        %1051 = vrot.lane.b32.xlu0 %v1023, 32
        %v1052 = vpop.permute.xlu0 %1051
        %1053 = vrot.lane.b32.xlu0 %v1024, 32
        %v1054 = vpop.permute.xlu0 %1053
        %1055 = vrot.lane.b32.xlu0 %v1025, 32
        %v1056 = vpop.permute.xlu0 %1055
        %1057 = vrot.lane.b32.xlu0 %v1026, 32
        %v1058 = vpop.permute.xlu0 %1057
        %v1059 = vsel %vm486, %v1056, %v1058
        %v1060 = vsel %vm486, %v1054, %v1056
        %v1061 = vsel %vm486, %v1052, %v1054
        %v1062 = vsel %vm486, %v1058, %v1052
        %v1063 = vld [vmem:[%s491] sm:$0xff]
        %v1064 = vld [vmem:[%s491 + $0x8] sm:$0xff]
        %v1065 = vld [vmem:[%s491 + $0x10] sm:$0xff]
        %v1066 = vld [vmem:[%s491 + $0x18] sm:$0xff]
        %v1067 = vmul.f32 %v1062, %v1063
        %v1068 = vmul.f32 %v1061, %v1064
        %v1069 = vmul.f32 %v1060, %v1065
        %v1070 = vmul.f32 %v1059, %v1066
        %v1071 = vadd.f32 %v1047, %v1067
        %v1072 = vadd.f32 %v1048, %v1068
        %v1073 = vadd.f32 %v1049, %v1069
        %v1074 = vadd.f32 %v1050, %v1070
        %v1075 = vld [vmem:[%s504] sm:$0xff]
        %v1076 = vld [vmem:[%s504 + $0x8] sm:$0xff]
        %v1077 = vld [vmem:[%s504 + $0x10] sm:$0xff]
        %v1078 = vld [vmem:[%s504 + $0x18] sm:$0xff]
        %v1079 = vmul.f32 %v1023, %v1075
        %v1080 = vmul.f32 %v1024, %v1076
        %v1081 = vmul.f32 %v1025, %v1077
        %v1082 = vmul.f32 %v1026, %v1078
        %v1083 = vadd.f32 %v1071, %v1079
        %v1084 = vadd.f32 %v1072, %v1080
        %v1085 = vadd.f32 %v1073, %v1081
        %v1086 = vadd.f32 %v1074, %v1082
        %1087 = vrot.lane.b32.xlu0 %v1023, 96
        %v1088 = vpop.permute.xlu0 %1087
        %1089 = vrot.lane.b32.xlu0 %v1024, 96
        %v1090 = vpop.permute.xlu0 %1089
        %1091 = vrot.lane.b32.xlu0 %v1025, 96
        %v1092 = vpop.permute.xlu0 %1091
        %1093 = vrot.lane.b32.xlu0 %v1026, 96
        %v1094 = vpop.permute.xlu0 %1093
        %v1095 = vsel %vm525, %v1092, %v1094
        %v1096 = vsel %vm525, %v1090, %v1092
        %v1097 = vsel %vm525, %v1088, %v1090
        %v1098 = vsel %vm525, %v1094, %v1088
        %v1099 = vld [vmem:[%s530] sm:$0xff]
        %v1100 = vld [vmem:[%s530 + $0x8] sm:$0xff]
        %v1101 = vld [vmem:[%s530 + $0x10] sm:$0xff]
        %v1102 = vld [vmem:[%s530 + $0x18] sm:$0xff]
        %v1103 = vmul.f32 %v1097, %v1099
        %v1104 = vmul.f32 %v1096, %v1100
        %v1105 = vmul.f32 %v1095, %v1101
        %v1106 = vmul.f32 %v1098, %v1102
        %v1107 = vadd.f32 %v1083, %v1103
        %v1108 = vadd.f32 %v1084, %v1104
        %v1109 = vadd.f32 %v1085, %v1105
        %v1110 = vadd.f32 %v1086, %v1106
        %v1111 = vld [vmem:[%s543] sm:$0xff]
        %v1112 = vld [vmem:[%s543 + $0x8] sm:$0xff]
        %v1113 = vld [vmem:[%s543 + $0x10] sm:$0xff]
        %v1114 = vld [vmem:[%s543 + $0x18] sm:$0xff]
        %v1115 = vmul.f32 %v1037, %v1111
        %v1116 = vmul.f32 %v1036, %v1112
        %v1117 = vmul.f32 %v1035, %v1113
        %v1118 = vmul.f32 %v1038, %v1114
        %v1119 = vadd.f32 %v1107, %v1115
        %v1120 = vadd.f32 %v1108, %v1116
        %v1121 = vadd.f32 %v1109, %v1117
        %v1122 = vadd.f32 %v1110, %v1118
        %v1123 = vsel %vm556, %v1015, %v1011
        %v1124 = vsel %vm556, %v1016, %v1012
        %v1125 = vsel %vm556, %v1017, %v1013
        %v1126 = vsel %vm556, %v1018, %v1014
        %v1127 = vrot.slane %v1123, 7
        %v1128 = vrot.slane %v1124, 7
        %v1129 = vrot.slane %v1125, 7
        %v1130 = vrot.slane %v1126, 7
        %1131 = vrot.lane.b32.xlu0 %v1127, 64
        %v1132 = vpop.permute.xlu0 %1131
        %1133 = vrot.lane.b32.xlu0 %v1128, 64
        %v1134 = vpop.permute.xlu0 %1133
        %1135 = vrot.lane.b32.xlu0 %v1129, 64
        %v1136 = vpop.permute.xlu0 %1135
        %1137 = vrot.lane.b32.xlu0 %v1130, 64
        %v1138 = vpop.permute.xlu0 %1137
        %v1139 = vsel %vm461, %v1136, %v1138
        %v1140 = vsel %vm461, %v1134, %v1136
        %v1141 = vsel %vm461, %v1132, %v1134
        %v1142 = vsel %vm461, %v1138, %v1132
        %v1143 = vld [vmem:[%s577] sm:$0xff]
        %v1144 = vld [vmem:[%s577 + $0x8] sm:$0xff]
        %v1145 = vld [vmem:[%s577 + $0x10] sm:$0xff]
        %v1146 = vld [vmem:[%s577 + $0x18] sm:$0xff]
        %v1147 = vmul.f32 %v1142, %v1143
        %v1148 = vmul.f32 %v1141, %v1144
        %v1149 = vmul.f32 %v1140, %v1145
        %v1150 = vmul.f32 %v1139, %v1146
        %v1151 = vadd.f32 %v1119, %v1147
        %v1152 = vadd.f32 %v1120, %v1148
        %v1153 = vadd.f32 %v1121, %v1149
        %v1154 = vadd.f32 %v1122, %v1150
        %1155 = vrot.lane.b32.xlu0 %v1127, 32
        %v1156 = vpop.permute.xlu0 %1155
        %1157 = vrot.lane.b32.xlu0 %v1128, 32
        %v1158 = vpop.permute.xlu0 %1157
        %1159 = vrot.lane.b32.xlu0 %v1129, 32
        %v1160 = vpop.permute.xlu0 %1159
        %1161 = vrot.lane.b32.xlu0 %v1130, 32
        %v1162 = vpop.permute.xlu0 %1161
        %v1163 = vsel %vm486, %v1160, %v1162
        %v1164 = vsel %vm486, %v1158, %v1160
        %v1165 = vsel %vm486, %v1156, %v1158
        %v1166 = vsel %vm486, %v1162, %v1156
        %v1167 = vld [vmem:[%s602] sm:$0xff]
        %v1168 = vld [vmem:[%s602 + $0x8] sm:$0xff]
        %v1169 = vld [vmem:[%s602 + $0x10] sm:$0xff]
        %v1170 = vld [vmem:[%s602 + $0x18] sm:$0xff]
        %v1171 = vmul.f32 %v1166, %v1167
        %v1172 = vmul.f32 %v1165, %v1168
        %v1173 = vmul.f32 %v1164, %v1169
        %v1174 = vmul.f32 %v1163, %v1170
        %v1175 = vadd.f32 %v1151, %v1171
        %v1176 = vadd.f32 %v1152, %v1172
        %v1177 = vadd.f32 %v1153, %v1173
        %v1178 = vadd.f32 %v1154, %v1174
        %v1179 = vld [vmem:[%s615] sm:$0xff]
        %v1180 = vld [vmem:[%s615 + $0x8] sm:$0xff]
        %v1181 = vld [vmem:[%s615 + $0x10] sm:$0xff]
        %v1182 = vld [vmem:[%s615 + $0x18] sm:$0xff]
        %v1183 = vmul.f32 %v1127, %v1179
        %v1184 = vmul.f32 %v1128, %v1180
        %v1185 = vmul.f32 %v1129, %v1181
        %v1186 = vmul.f32 %v1130, %v1182
        %v1187 = vadd.f32 %v1175, %v1183
        %v1188 = vadd.f32 %v1176, %v1184
        %v1189 = vadd.f32 %v1177, %v1185
        %v1190 = vadd.f32 %v1178, %v1186
        %1191 = vrot.lane.b32.xlu0 %v1127, 96
        %v1192 = vpop.permute.xlu0 %1191
        %1193 = vrot.lane.b32.xlu0 %v1128, 96
        %v1194 = vpop.permute.xlu0 %1193
        %1195 = vrot.lane.b32.xlu0 %v1129, 96
        %v1196 = vpop.permute.xlu0 %1195
        %1197 = vrot.lane.b32.xlu0 %v1130, 96
        %v1198 = vpop.permute.xlu0 %1197
        %v1199 = vsel %vm525, %v1196, %v1198
        %v1200 = vsel %vm525, %v1194, %v1196
        %v1201 = vsel %vm525, %v1192, %v1194
        %v1202 = vsel %vm525, %v1198, %v1192
        %v1203 = vld [vmem:[%s640] sm:$0xff]
        %v1204 = vld [vmem:[%s640 + $0x8] sm:$0xff]
        %v1205 = vld [vmem:[%s640 + $0x10] sm:$0xff]
        %v1206 = vld [vmem:[%s640 + $0x18] sm:$0xff]
        %v1207 = vmul.f32 %v1201, %v1203
        %v1208 = vmul.f32 %v1200, %v1204
        %v1209 = vmul.f32 %v1199, %v1205
        %v1210 = vmul.f32 %v1202, %v1206
        %v1211 = vadd.f32 %v1187, %v1207
        %v1212 = vadd.f32 %v1188, %v1208
        %v1213 = vadd.f32 %v1189, %v1209
        %v1214 = vadd.f32 %v1190, %v1210
        %v1215 = vld [vmem:[%s653] sm:$0xff]
        %v1216 = vld [vmem:[%s653 + $0x8] sm:$0xff]
        %v1217 = vld [vmem:[%s653 + $0x10] sm:$0xff]
        %v1218 = vld [vmem:[%s653 + $0x18] sm:$0xff]
        %v1219 = vmul.f32 %v1141, %v1215
        %v1220 = vmul.f32 %v1140, %v1216
        %v1221 = vmul.f32 %v1139, %v1217
        %v1222 = vmul.f32 %v1142, %v1218
        %v1223 = vadd.f32 %v1211, %v1219
        %v1224 = vadd.f32 %v1212, %v1220
        %v1225 = vadd.f32 %v1213, %v1221
        %v1226 = vadd.f32 %v1214, %v1222
        %1227 = vrot.lane.b32.xlu0 %v1011, 64
        %v1228 = vpop.permute.xlu0 %1227
        %1229 = vrot.lane.b32.xlu0 %v1012, 64
        %v1230 = vpop.permute.xlu0 %1229
        %1231 = vrot.lane.b32.xlu0 %v1013, 64
        %v1232 = vpop.permute.xlu0 %1231
        %1233 = vrot.lane.b32.xlu0 %v1014, 64
        %v1234 = vpop.permute.xlu0 %1233
        %v1235 = vsel %vm461, %v1232, %v1234
        %v1236 = vsel %vm461, %v1230, %v1232
        %v1237 = vsel %vm461, %v1228, %v1230
        %v1238 = vsel %vm461, %v1234, %v1228
        %v1239 = vld [vmem:[%s678] sm:$0xff]
        %v1240 = vld [vmem:[%s678 + $0x8] sm:$0xff]
        %v1241 = vld [vmem:[%s678 + $0x10] sm:$0xff]
        %v1242 = vld [vmem:[%s678 + $0x18] sm:$0xff]
        %v1243 = vmul.f32 %v1238, %v1239
        %v1244 = vmul.f32 %v1237, %v1240
        %v1245 = vmul.f32 %v1236, %v1241
        %v1246 = vmul.f32 %v1235, %v1242
        %v1247 = vadd.f32 %v1223, %v1243
        %v1248 = vadd.f32 %v1224, %v1244
        %v1249 = vadd.f32 %v1225, %v1245
        %v1250 = vadd.f32 %v1226, %v1246
        %1251 = vrot.lane.b32.xlu0 %v1011, 32
        %v1252 = vpop.permute.xlu0 %1251
        %1253 = vrot.lane.b32.xlu0 %v1012, 32
        %v1254 = vpop.permute.xlu0 %1253
        %1255 = vrot.lane.b32.xlu0 %v1013, 32
        %v1256 = vpop.permute.xlu0 %1255
        %1257 = vrot.lane.b32.xlu0 %v1014, 32
        %v1258 = vpop.permute.xlu0 %1257
        %v1259 = vsel %vm486, %v1256, %v1258
        %v1260 = vsel %vm486, %v1254, %v1256
        %v1261 = vsel %vm486, %v1252, %v1254
        %v1262 = vsel %vm486, %v1258, %v1252
        %v1263 = vld [vmem:[%s703] sm:$0xff]
        %v1264 = vld [vmem:[%s703 + $0x8] sm:$0xff]
        %v1265 = vld [vmem:[%s703 + $0x10] sm:$0xff]
        %v1266 = vld [vmem:[%s703 + $0x18] sm:$0xff]
        %v1267 = vmul.f32 %v1262, %v1263
        %v1268 = vmul.f32 %v1261, %v1264
        %v1269 = vmul.f32 %v1260, %v1265
        %v1270 = vmul.f32 %v1259, %v1266
        %v1271 = vadd.f32 %v1247, %v1267
        %v1272 = vadd.f32 %v1248, %v1268
        %v1273 = vadd.f32 %v1249, %v1269
        %v1274 = vadd.f32 %v1250, %v1270
        %v1275 = vld [vmem:[%s716] sm:$0xff]
        %v1276 = vld [vmem:[%s716 + $0x8] sm:$0xff]
        %v1277 = vld [vmem:[%s716 + $0x10] sm:$0xff]
        %v1278 = vld [vmem:[%s716 + $0x18] sm:$0xff]
        %v1279 = vmul.f32 %v1011, %v1275
        %v1280 = vmul.f32 %v1012, %v1276
        %v1281 = vmul.f32 %v1013, %v1277
        %v1282 = vmul.f32 %v1014, %v1278
        %v1283 = vadd.f32 %v1271, %v1279
        %v1284 = vadd.f32 %v1272, %v1280
        %v1285 = vadd.f32 %v1273, %v1281
        %v1286 = vadd.f32 %v1274, %v1282
        %1287 = vrot.lane.b32.xlu0 %v1011, 96
        %v1288 = vpop.permute.xlu0 %1287
        %1289 = vrot.lane.b32.xlu0 %v1012, 96
        %v1290 = vpop.permute.xlu0 %1289
        %1291 = vrot.lane.b32.xlu0 %v1013, 96
        %v1292 = vpop.permute.xlu0 %1291
        %1293 = vrot.lane.b32.xlu0 %v1014, 96
        %v1294 = vpop.permute.xlu0 %1293
        %v1295 = vsel %vm525, %v1292, %v1294
        %v1296 = vsel %vm525, %v1290, %v1292
        %v1297 = vsel %vm525, %v1288, %v1290
        %v1298 = vsel %vm525, %v1294, %v1288
        %v1299 = vld [vmem:[%s741] sm:$0xff]
        %v1300 = vld [vmem:[%s741 + $0x8] sm:$0xff]
        %v1301 = vld [vmem:[%s741 + $0x10] sm:$0xff]
        %v1302 = vld [vmem:[%s741 + $0x18] sm:$0xff]
        %v1303 = vmul.f32 %v1297, %v1299
        %v1304 = vmul.f32 %v1296, %v1300
        %v1305 = vmul.f32 %v1295, %v1301
        %v1306 = vmul.f32 %v1298, %v1302
        %v1307 = vadd.f32 %v1283, %v1303
        %v1308 = vadd.f32 %v1284, %v1304
        %v1309 = vadd.f32 %v1285, %v1305
        %v1310 = vadd.f32 %v1286, %v1306
        %v1311 = vld [vmem:[%s754] sm:$0xff]
        %v1312 = vld [vmem:[%s754 + $0x8] sm:$0xff]
        %v1313 = vld [vmem:[%s754 + $0x10] sm:$0xff]
        %v1314 = vld [vmem:[%s754 + $0x18] sm:$0xff]
        %v1315 = vmul.f32 %v1237, %v1311
        %v1316 = vmul.f32 %v1236, %v1312
        %v1317 = vmul.f32 %v1235, %v1313
        %v1318 = vmul.f32 %v1238, %v1314
        %v1319 = vadd.f32 %v1307, %v1315
        %v1320 = vadd.f32 %v1308, %v1316
        %v1321 = vadd.f32 %v1309, %v1317
        %v1322 = vadd.f32 %v1310, %v1318
        %v1323 = vsel %vm767, %v430, %v1011
        %v1324 = vsel %vm767, %v431, %v1012
        %v1325 = vsel %vm767, %v432, %v1013
        %v1326 = vsel %vm767, %v433, %v1014
        %v1327 = vrot.slane %v1323, 1
        %v1328 = vrot.slane %v1324, 1
        %v1329 = vrot.slane %v1325, 1
        %v1330 = vrot.slane %v1326, 1
        %1331 = vrot.lane.b32.xlu0 %v1327, 64
        %v1332 = vpop.permute.xlu0 %1331
        %1333 = vrot.lane.b32.xlu0 %v1328, 64
        %v1334 = vpop.permute.xlu0 %1333
        %1335 = vrot.lane.b32.xlu0 %v1329, 64
        %v1336 = vpop.permute.xlu0 %1335
        %1337 = vrot.lane.b32.xlu0 %v1330, 64
        %v1338 = vpop.permute.xlu0 %1337
        %v1339 = vsel %vm461, %v1336, %v1338
        %v1340 = vsel %vm461, %v1334, %v1336
        %v1341 = vsel %vm461, %v1332, %v1334
        %v1342 = vsel %vm461, %v1338, %v1332
        %v1343 = vld [vmem:[%s788] sm:$0xff]
        %v1344 = vld [vmem:[%s788 + $0x8] sm:$0xff]
        %v1345 = vld [vmem:[%s788 + $0x10] sm:$0xff]
        %v1346 = vld [vmem:[%s788 + $0x18] sm:$0xff]
        %v1347 = vmul.f32 %v1342, %v1343
        %v1348 = vmul.f32 %v1341, %v1344
        %v1349 = vmul.f32 %v1340, %v1345
        %v1350 = vmul.f32 %v1339, %v1346
        %v1351 = vadd.f32 %v1319, %v1347
        %v1352 = vadd.f32 %v1320, %v1348
        %v1353 = vadd.f32 %v1321, %v1349
        %v1354 = vadd.f32 %v1322, %v1350
        %1355 = vrot.lane.b32.xlu0 %v1327, 32
        %v1356 = vpop.permute.xlu0 %1355
        %1357 = vrot.lane.b32.xlu0 %v1328, 32
        %v1358 = vpop.permute.xlu0 %1357
        %1359 = vrot.lane.b32.xlu0 %v1329, 32
        %v1360 = vpop.permute.xlu0 %1359
        %1361 = vrot.lane.b32.xlu0 %v1330, 32
        %v1362 = vpop.permute.xlu0 %1361
        %v1363 = vsel %vm486, %v1360, %v1362
        %v1364 = vsel %vm486, %v1358, %v1360
        %v1365 = vsel %vm486, %v1356, %v1358
        %v1366 = vsel %vm486, %v1362, %v1356
        %v1367 = vld [vmem:[%s813] sm:$0xff]
        %v1368 = vld [vmem:[%s813 + $0x8] sm:$0xff]
        %v1369 = vld [vmem:[%s813 + $0x10] sm:$0xff]
        %v1370 = vld [vmem:[%s813 + $0x18] sm:$0xff]
        %v1371 = vmul.f32 %v1366, %v1367
        %v1372 = vmul.f32 %v1365, %v1368
        %v1373 = vmul.f32 %v1364, %v1369
        %v1374 = vmul.f32 %v1363, %v1370
        %v1375 = vadd.f32 %v1351, %v1371
        %v1376 = vadd.f32 %v1352, %v1372
        %v1377 = vadd.f32 %v1353, %v1373
        %v1378 = vadd.f32 %v1354, %v1374
        %v1379 = vld [vmem:[%s826] sm:$0xff]
        %v1380 = vld [vmem:[%s826 + $0x8] sm:$0xff]
        %v1381 = vld [vmem:[%s826 + $0x10] sm:$0xff]
        %v1382 = vld [vmem:[%s826 + $0x18] sm:$0xff]
        %v1383 = vmul.f32 %v1327, %v1379
        %v1384 = vmul.f32 %v1328, %v1380
        %v1385 = vmul.f32 %v1329, %v1381
        %v1386 = vmul.f32 %v1330, %v1382
        %v1387 = vadd.f32 %v1375, %v1383
        %v1388 = vadd.f32 %v1376, %v1384
        %v1389 = vadd.f32 %v1377, %v1385
        %v1390 = vadd.f32 %v1378, %v1386
        %1391 = vrot.lane.b32.xlu0 %v1327, 96
        %v1392 = vpop.permute.xlu0 %1391
        %1393 = vrot.lane.b32.xlu0 %v1328, 96
        %v1394 = vpop.permute.xlu0 %1393
        %1395 = vrot.lane.b32.xlu0 %v1329, 96
        %v1396 = vpop.permute.xlu0 %1395
        %1397 = vrot.lane.b32.xlu0 %v1330, 96
        %v1398 = vpop.permute.xlu0 %1397
        %v1399 = vsel %vm525, %v1396, %v1398
        %v1400 = vsel %vm525, %v1394, %v1396
        %v1401 = vsel %vm525, %v1392, %v1394
        %v1402 = vsel %vm525, %v1398, %v1392
        %v1403 = vld [vmem:[%s851] sm:$0xff]
        %v1404 = vld [vmem:[%s851 + $0x8] sm:$0xff]
        %v1405 = vld [vmem:[%s851 + $0x10] sm:$0xff]
        %v1406 = vld [vmem:[%s851 + $0x18] sm:$0xff]
        %v1407 = vmul.f32 %v1401, %v1403
        %v1408 = vmul.f32 %v1400, %v1404
        %v1409 = vmul.f32 %v1399, %v1405
        %v1410 = vmul.f32 %v1402, %v1406
        %v1411 = vadd.f32 %v1387, %v1407
        %v1412 = vadd.f32 %v1388, %v1408
        %v1413 = vadd.f32 %v1389, %v1409
        %v1414 = vadd.f32 %v1390, %v1410
        %v1415 = vld [vmem:[%s864] sm:$0xff]
        %v1416 = vld [vmem:[%s864 + $0x8] sm:$0xff]
        %v1417 = vld [vmem:[%s864 + $0x10] sm:$0xff]
        %v1418 = vld [vmem:[%s864 + $0x18] sm:$0xff]
        %v1419 = vmul.f32 %v1341, %v1415
        %v1420 = vmul.f32 %v1340, %v1416
        %v1421 = vmul.f32 %v1339, %v1417
        %v1422 = vmul.f32 %v1342, %v1418
        %v1423 = vadd.f32 %v1411, %v1419
        %v1424 = vadd.f32 %v1412, %v1420
        %v1425 = vadd.f32 %v1413, %v1421
        %v1426 = vadd.f32 %v1414, %v1422
        %v1427 = vsel %vm877, %v430, %v1011
        %v1428 = vsel %vm877, %v431, %v1012
        %v1429 = vsel %vm877, %v432, %v1013
        %v1430 = vsel %vm877, %v433, %v1014
        %v1431 = vrot.slane %v1427, 2
        %v1432 = vrot.slane %v1428, 2
        %v1433 = vrot.slane %v1429, 2
        %v1434 = vrot.slane %v1430, 2
        %1435 = vrot.lane.b32.xlu0 %v1431, 64
        %v1436 = vpop.permute.xlu0 %1435
        %1437 = vrot.lane.b32.xlu0 %v1432, 64
        %v1438 = vpop.permute.xlu0 %1437
        %1439 = vrot.lane.b32.xlu0 %v1433, 64
        %v1440 = vpop.permute.xlu0 %1439
        %1441 = vrot.lane.b32.xlu0 %v1434, 64
        %v1442 = vpop.permute.xlu0 %1441
        %v1443 = vsel %vm461, %v1440, %v1442
        %v1444 = vsel %vm461, %v1438, %v1440
        %v1445 = vsel %vm461, %v1436, %v1438
        %v1446 = vsel %vm461, %v1442, %v1436
        %v1447 = vld [vmem:[%s898] sm:$0xff]
        %v1448 = vld [vmem:[%s898 + $0x8] sm:$0xff]
        %v1449 = vld [vmem:[%s898 + $0x10] sm:$0xff]
        %v1450 = vld [vmem:[%s898 + $0x18] sm:$0xff]
        %v1451 = vmul.f32 %v1446, %v1447
        %v1452 = vmul.f32 %v1445, %v1448
        %v1453 = vmul.f32 %v1444, %v1449
        %v1454 = vmul.f32 %v1443, %v1450
        %v1455 = vadd.f32 %v1423, %v1451
        %v1456 = vadd.f32 %v1424, %v1452
        %v1457 = vadd.f32 %v1425, %v1453
        %v1458 = vadd.f32 %v1426, %v1454
        %1459 = vrot.lane.b32.xlu0 %v1431, 32
        %v1460 = vpop.permute.xlu0 %1459
        %1461 = vrot.lane.b32.xlu0 %v1432, 32
        %v1462 = vpop.permute.xlu0 %1461
        %1463 = vrot.lane.b32.xlu0 %v1433, 32
        %v1464 = vpop.permute.xlu0 %1463
        %1465 = vrot.lane.b32.xlu0 %v1434, 32
        %v1466 = vpop.permute.xlu0 %1465
        %v1467 = vsel %vm486, %v1464, %v1466
        %v1468 = vsel %vm486, %v1462, %v1464
        %v1469 = vsel %vm486, %v1460, %v1462
        %v1470 = vsel %vm486, %v1466, %v1460
        %v1471 = vld [vmem:[%s923] sm:$0xff]
        %v1472 = vld [vmem:[%s923 + $0x8] sm:$0xff]
        %v1473 = vld [vmem:[%s923 + $0x10] sm:$0xff]
        %v1474 = vld [vmem:[%s923 + $0x18] sm:$0xff]
        %v1475 = vmul.f32 %v1470, %v1471
        %v1476 = vmul.f32 %v1469, %v1472
        %v1477 = vmul.f32 %v1468, %v1473
        %v1478 = vmul.f32 %v1467, %v1474
        %v1479 = vadd.f32 %v1455, %v1475
        %v1480 = vadd.f32 %v1456, %v1476
        %v1481 = vadd.f32 %v1457, %v1477
        %v1482 = vadd.f32 %v1458, %v1478
        %v1483 = vld [vmem:[%s936] sm:$0xff]
        %v1484 = vld [vmem:[%s936 + $0x8] sm:$0xff]
        %v1485 = vld [vmem:[%s936 + $0x10] sm:$0xff]
        %v1486 = vld [vmem:[%s936 + $0x18] sm:$0xff]
        %v1487 = vmul.f32 %v1431, %v1483
        %v1488 = vmul.f32 %v1432, %v1484
        %v1489 = vmul.f32 %v1433, %v1485
        %v1490 = vmul.f32 %v1434, %v1486
        %v1491 = vadd.f32 %v1479, %v1487
        %v1492 = vadd.f32 %v1480, %v1488
        %v1493 = vadd.f32 %v1481, %v1489
        %v1494 = vadd.f32 %v1482, %v1490
        %1495 = vrot.lane.b32.xlu0 %v1431, 96
        %v1496 = vpop.permute.xlu0 %1495
        %1497 = vrot.lane.b32.xlu0 %v1432, 96
        %v1498 = vpop.permute.xlu0 %1497
        %1499 = vrot.lane.b32.xlu0 %v1433, 96
        %v1500 = vpop.permute.xlu0 %1499
        %1501 = vrot.lane.b32.xlu0 %v1434, 96
        %v1502 = vpop.permute.xlu0 %1501
        %v1503 = vsel %vm525, %v1500, %v1502
        %v1504 = vsel %vm525, %v1498, %v1500
        %v1505 = vsel %vm525, %v1496, %v1498
        %v1506 = vsel %vm525, %v1502, %v1496
        %v1507 = vld [vmem:[%s961] sm:$0xff]
        %v1508 = vld [vmem:[%s961 + $0x8] sm:$0xff]
        %v1509 = vld [vmem:[%s961 + $0x10] sm:$0xff]
        %v1510 = vld [vmem:[%s961 + $0x18] sm:$0xff]
        %v1511 = vmul.f32 %v1505, %v1507
        %v1512 = vmul.f32 %v1504, %v1508
        %v1513 = vmul.f32 %v1503, %v1509
        %v1514 = vmul.f32 %v1506, %v1510
        %v1515 = vadd.f32 %v1491, %v1511
        %v1516 = vadd.f32 %v1492, %v1512
        %v1517 = vadd.f32 %v1493, %v1513
        %v1518 = vadd.f32 %v1494, %v1514
        %v1519 = vld [vmem:[%s974] sm:$0xff]
        %v1520 = vld [vmem:[%s974 + $0x8] sm:$0xff]
        %v1521 = vld [vmem:[%s974 + $0x10] sm:$0xff]
        %v1522 = vld [vmem:[%s974 + $0x18] sm:$0xff]
        %v1523 = vmul.f32 %v1445, %v1519
        %v1524 = vmul.f32 %v1444, %v1520
        %v1525 = vmul.f32 %v1443, %v1521
        %v1526 = vmul.f32 %v1446, %v1522
        %v1527 = vadd.f32 %v1515, %v1523
        %v1528 = vadd.f32 %v1516, %v1524
        %v1529 = vadd.f32 %v1517, %v1525
        %v1530 = vadd.f32 %v1518, %v1526
        %v1531 = vmul.f32 %v1527, 0.5
        %v1532 = vmul.f32 %v1528, 0.5
        %v1533 = vmul.f32 %v1529, 0.5
        %v1534 = vmul.f32 %v1530, 0.5
        %v1535 = vmul.f32 %v1527, 0.70710677
        %v1536 = vmul.f32 %v1528, 0.70710677
        %v1537 = vmul.f32 %v1529, 0.70710677
        %v1538 = vmul.f32 %v1530, 0.70710677
        %v1539 = verf.f32.pop %v1535
        %v1540 = verf.f32.pop %v1536
        %v1541 = verf.f32.pop %v1537
        %v1542 = verf.f32.pop %v1538
        %v1543 = vadd.f32 %v1539, 1.0
        %v1544 = vadd.f32 %v1540, 1.0
        %v1545 = vadd.f32 %v1541, 1.0
        %v1546 = vadd.f32 %v1542, 1.0
        %v1547 = vmul.f32 %v1531, %v1543
        %v1548 = vmul.f32 %v1532, %v1544
        %v1549 = vmul.f32 %v1533, %v1545
        %v1550 = vmul.f32 %v1534, %v1546
        %1551 = vst [vmem:[%s393 + $0x20] sm:$0xff] %v1547
        %1552 = vst [vmem:[%s393 + $0x28] sm:$0xff] %v1548
        %1553 = vst [vmem:[%s393 + $0x30] sm:$0xff] %v1549
        %1554 = vst [vmem:[%s393 + $0x38] sm:$0xff] %v1550
        %s1555 = sand.u32 %s190, 1
        %s1556 = scalar_lea.sflag [#allocation4], %s1555
        %s1557 = sand.u32 %s190, 1
        %s1558 = smul.addr %s1557, 64
        %s1559 = scalar_lea.vmem [#allocation11], %s1558
        // Predicated region
        $region61: #{tpu_custom_call.1} parent=39 // pred_check
          %p1560 = pneg %p200
        $region62: #{tpu_custom_call.1} parent=39 // pred_check_branch
          %1562 = sbr.rel (%p1560) target = $region64
        $region63: #{tpu_custom_call.1} parent=39 // pred_region
          %s1563 = smul.u32 2, %s31
          %s1565 = ssub.s32 1024, 1024
          %1566 = vsyncadd %s1556, %s1565
          %s1567 = smul.addr %s1563, 4
          %s1568 = smul.addr %s30, 8
          %s1569 = sadd.s32 %s1567, %s1568
          %s1570 = smul.addr %s1569, 128
          %s1571 = scalar_lea.hbm %s5, %s1570
          %s1572 = sshll.u32 %s1559, 4
          %s1573 = int_to_ptr.vmem [resolvable:$true] %s1572
          %1578 = dma.vmem_to_hbm [thread:$0]  %s1573, 1024, %s1571, %s1556, 512, 512, 32
        $region64: #{tpu_custom_call.1} parent=39 // pred_fallthru
          _
      $region40: #{tpu_custom_call.1} parent=5 // pred_fallthru
        _
      %p1579 = scmp.le.s32.totalorder 2, %s21
      // Predicated region
      $region65: #{tpu_custom_call.1} parent=5 // pred_check
        %p1580 = pneg %p1579
      $region66: #{tpu_custom_call.1} parent=5 // pred_check_branch
        %1582 = sbr.rel (%p1580) target = $region68
      $region67: #{tpu_custom_call.1} parent=5 // pred_region
        %s1583 = ssub.s32 %s21, 2
        // Predicated region
        $region69: #{tpu_custom_call.1} parent=67 // pred_check
          %p1584 = pneg %p206
        $region70: #{tpu_custom_call.1} parent=67 // pred_check_branch
          %1586 = sbr.rel (%p1584) target = $region72
        $region71: #{tpu_custom_call.1} parent=67 // pred_region
          %s1587 = sand.u32 %s191, 1
          %s1588 = scalar_lea.sflag [#allocation4], %s1587
          %s1589 = sand.u32 %s191, 1
          %s1590 = smul.addr %s1589, 64
          %s1591 = scalar_lea.vmem [#allocation11], %s1590
          %1592 = dma.done %s1588, 1024
        $region72: #{tpu_custom_call.1} parent=67 // pred_fallthru
          _
      $region68: #{tpu_custom_call.1} parent=5 // pred_fallthru
        _
    $region6: #{tpu_custom_call.1} parent=1 // loop_footer
      %s25 = sadd.s32 1, %s21
    $region7: #{tpu_custom_call.1} parent=1 // loop_footer_branch
      %20 = sbr.rel target = $region3
    $region8: #{tpu_custom_call.1} parent=1 // loop_exit
      _
    %1593 = vsyncpa [#allocation3], 1
    %s1594 = scalar_lea.sflag [#allocation3], 1
    %1595 = vsyncpa %s1594, 1
    %1596 = vsyncpa [#allocation6], 1
    %s1597 = scalar_lea.sflag [#allocation6], 1
    %1598 = vsyncpa %s1597, 1
    %1599 = vsyncpa [#allocation9], 1
    %1600 = vsyncpa [#allocation4], 1
    %s1601 = scalar_lea.sflag [#allocation4], 1
    %1602 = vsyncpa %s1601, 1

</llo_original>
